<compile_context>
chip_gen: v7x
topology: tpu7x:2x2x1
jax: 0.10.0
libtpu: 0.0.40
codegen_flags: <defaults>
</compile_context>

<pallas_src>
import functools

import jax
import jax.numpy as jnp
from jax import lax
from jax.experimental import pallas as pl
from jax.experimental.pallas import tpu as pltpu


_MC_MAX = 1024                   # max lane width of one target chunk (128-multiple)
_BT_MAX = 8                      # max batches folded into one grid step
_DEFAULT_PHYS_VMEM = 64 << 20    # conservative default (v7x per-core VMEM)


def _round_up(v, k):
    return -(-v // k) * k


def _physical_vmem_bytes():
    try:
        info = pltpu.get_tpu_info()
        return int(getattr(info, "vmem_capacity_bytes", _DEFAULT_PHYS_VMEM))
    except Exception:  # pragma: no cover - conservative fallback
        return _DEFAULT_PHYS_VMEM


def _vmem_bytes(bt, n, mc, fw):
    """Rough VMEM working set (bytes) for one grid step, f32 everywhere."""
    f = 4
    x_blk = bt * 8 * _round_up(n, 128) * f            # (bt,3,N) channel-first pred
    xn_blk = bt * _round_up(n, 8) * 128 * f           # (bt,N,1) pred sq. norms (lane pad)
    y_blk = bt * 8 * _round_up(mc, 128) * f           # (bt,3,mc) target chunk
    o_blk = bt * 8 * 128 * f                          # (bt,1,128) output
    io = 2 * (x_blk + xn_blk + y_blk + o_blk)         # double-buffered blocks
    scr = (bt * _round_up(n, 8) * _round_up(fw, 128) * f
           + bt * 8 * _round_up(fw, 128) * f)         # run_min + colsum scratch
    work = 2 * _round_up(n, 8) * _round_up(mc, 128) * f   # d tile + MXU result
    return io + scr + work


def _choose_tiling(b, n, m, budget):
    """Pick (mc, n_chunks, bt, fw) under a VMEM budget."""
    # mc: largest 128-multiple divisor of M within the budget (else full width).
    cands = [d for d in range(128, min(m, _MC_MAX) + 1, 128) if m % d == 0]
    if not cands:
        cands = [m]     # no 128-multiple divisor: single full-width chunk
    mc = cands[0]
    for cand in sorted(cands, reverse=True):
        fw_c = 128 if cand % 128 == 0 else cand
        if _vmem_bytes(1, n, cand, fw_c) <= budget:
            mc = cand
            break
    fw = 128 if mc % 128 == 0 else mc

    # bt: fold batches per step, but keep >= 2 grid steps when B >= 2 (megacore).
    bt_cap = min(b, _BT_MAX)
    if b >= 2:
        bt_cap = min(bt_cap, max(1, b // 2))
    bt = 1
    for cand in range(bt_cap, 0, -1):
        if b % cand == 0 and _vmem_bytes(cand, n, mc, fw) <= budget:
            bt = cand
            break
    return mc, m // mc, bt, fw


def _fold_min_lanes(d, fw):
    """Elementwise min of the fw-wide lane blocks of d's last axis (VALU only)."""
    mc = d.shape[-1]
    out = d[:, :fw]
    for t in range(1, mc // fw):
        out = jnp.minimum(out, d[:, t * fw:(t + 1) * fw])
    return out


def _fold_sum_lanes(v, fw):
    """Elementwise sum of the fw-wide lane blocks of v's last axis (VALU only)."""
    mc = v.shape[-1]
    out = v[:, :fw]
    for t in range(1, mc // fw):
        out = out + v[:, t * fw:(t + 1) * fw]
    return out


def _chamfer_kernel(x_ref, xn_ref, y_ref, cham_ref, run_min_ref, colsum_ref,
                    *, bt, n, m, fw):
    """One grid step: one target chunk (mc columns) for bt batches.

    x_ref:       (bt, 3, N)   pred, channel-first (resident across chunk steps)
    xn_ref:      (bt, N, 1)   pred squared norms (row-broadcast orientation)
    y_ref:       (bt, 3, mc)  target chunk, channel-first (pipelined over chunks)
    cham_ref:    (bt, 1, 128) per-batch chamfer output (written at last chunk)
    run_min_ref: (bt, N, fw)  running pred->target min, lane-folded to fw
    colsum_ref:  (bt, 1, fw)  lane-folded partial sums of target->pred column minima
    """
    c_idx = pl.program_id(1)
    last_c = pl.num_programs(1) - 1

    @pl.when(c_idx == 0)
    def _init():
        run_min_ref[...] = jnp.full(run_min_ref.shape, jnp.inf,
                                    dtype=run_min_ref.dtype)
        colsum_ref[...] = jnp.zeros(colsum_ref.shape, dtype=colsum_ref.dtype)

    for bi in range(bt):                                   # static, small
        x_cf = x_ref[bi]                                   # (3, N)
        xn = xn_ref[bi]                                    # (N, 1)
        yc = y_ref[bi]                                     # (3, mc)

        yn = jnp.sum(yc * yc, axis=0, keepdims=True)       # (1, mc)
        xm2 = x_cf * (-2.0)                                # fold -2 into small operand

        # MXU: (N, mc) cross term, contracting the K=3 channel axis of both
        # channel-first slabs (transposed-LHS matmul; no in-kernel transpose).
        cross = lax.dot_general(
            xm2, yc, (((0,), (0,)), ((), ())),
            preferred_element_type=jnp.float32,
            precision=lax.Precision.HIGHEST)               # (N, mc)

        # squared distances; clamp at 0 (decomposition cancellation can go
        # slightly negative; clamp-before-min == clamp-after-min at a 0 bound).
        d = jnp.maximum(xn + (yn + cross), 0.0)            # (N, mc)

        # NaN canary: 0.0 normally, NaN if any input coordinate is NaN
        # (adds always propagate NaN, independent of min/max NaN semantics).
        canary = (jnp.sum(x_cf) + jnp.sum(yc)) * 0.0

        # target -> pred: per-column min over rows, lane-folded partial sums.
        cmin = jnp.min(d, axis=0, keepdims=True)           # (1, mc)
        colsum_ref[bi] = colsum_ref[bi] + _fold_sum_lanes(cmin, fw) + canary

        # pred -> target: running elementwise min, lane-folded to fw.
        run_min_ref[bi] = jnp.minimum(run_min_ref[bi], _fold_min_lanes(d, fw))

    @pl.when(c_idx == last_c)
    def _finalize():
        for bi in range(bt):
            row_min = jnp.min(run_min_ref[bi], axis=1, keepdims=True)  # (N, 1)
            sum_x = jnp.sum(row_min)            # pred->target NN sq. distances
            sum_y = jnp.sum(colsum_ref[bi])     # target->pred NN sq. distances
            cham_b = sum_x * (1.0 / n) + sum_y * (1.0 / m)
            cham_ref[bi] = jnp.full((1, 128), cham_b, dtype=jnp.float32)


def combined_loss(pred_points, target_points, densities,
                  lambda_chamfer=1.0, lambda_density=0.1):
    """JAX/Pallas equivalent of CombinedLoss.forward.

    pred_points:   (B, N, 3)
    target_points: (B, M, 3)
    densities:     (B, ...)
    """
    pred = pred_points.astype(jnp.float32)
    tgt = target_points.astype(jnp.float32)
    dens = densities.astype(jnp.float32)

    B, N, _ = pred.shape
    M = tgt.shape[1]

    # channel-first slabs: point axis sits on the 128-lane dim -> contiguous DMA,
    # no lane-padded (N,3)/(M,3) tiles.
    pred_cf = jnp.swapaxes(pred, 1, 2)                          # (B, 3, N)
    tgt_cf = jnp.swapaxes(tgt, 1, 2)                            # (B, 3, M)
    # pred squared norms in row-broadcast orientation (tiny side input; avoids an
    # in-kernel lane->sublane relayout of the norm vector).
    pred_sqn = jnp.sum(pred * pred, axis=-1, keepdims=True)     # (B, N, 1)

    phys_vmem = _physical_vmem_bytes()
    budget = min(phys_vmem // 2, 40 << 20)
    mc, n_chunks, bt, fw = _choose_tiling(B, N, M, budget)

    need = _vmem_bytes(bt, N, mc, fw)
    vmem_limit = max(32 << 20, need + (8 << 20))
    vmem_limit = min(vmem_limit, max(phys_vmem - (8 << 20), need + (4 << 20)))
    vmem_limit = int(max(vmem_limit, need + (2 << 20)))

    grid = (B // bt, n_chunks)     # (parallel batch groups, arbitrary M chunks)

    kernel = functools.partial(_chamfer_kernel, bt=bt, n=N, m=M, fw=fw)

    cham_b = pl.pallas_call(
        kernel,
        out_shape=jax.ShapeDtypeStruct((B, 1, 128), jnp.float32),
        grid_spec=pltpu.PrefetchScalarGridSpec(
            num_scalar_prefetch=0,
            grid=grid,
            in_specs=[
                pl.BlockSpec((bt, 3, N), lambda g, c: (g, 0, 0)),
                pl.BlockSpec((bt, N, 1), lambda g, c: (g, 0, 0)),
                pl.BlockSpec((bt, 3, mc), lambda g, c: (g, 0, c)),
            ],
            out_specs=pl.BlockSpec((bt, 1, 128), lambda g, c: (g, 0, 0)),
            scratch_shapes=[
                pltpu.VMEM((bt, N, fw), jnp.float32),   # running pred->target min
                pltpu.VMEM((bt, 1, fw), jnp.float32),   # target->pred col-min sums
            ],
        ),
        compiler_params=pltpu.CompilerParams(
            dimension_semantics=("parallel", "arbitrary"),
            vmem_limit_bytes=vmem_limit,
        ),
    )(pred_cf, pred_sqn, tgt_cf)

    cham_per_batch = cham_b[:, 0, 0]                            # (B,)

    # NaN-in-input guard: the in-kernel canary turns the per-batch value NaN.
    has_nan = jnp.any(jnp.isnan(cham_per_batch))
    chamfer = jnp.sum(cham_per_batch) / B                       # batch_reduction="mean"
    chamfer = jnp.clip(chamfer, 0.0, 1.0e6)                     # torch.clamp(0, 1e6)
    chamfer = jnp.where(has_nan, 0.0, chamfer)
    # TODO(synk): the torch module also prints a warning on NaN; no side-effecting
    # print is emitted here.

    # Density L1 term: trivial mean(|x|); left to plain XLA per perf review.
    density = jnp.mean(jnp.abs(dens))

    total = lambda_chamfer * chamfer + lambda_density * density
    return {"total": total, "chamfer": chamfer, "density": density}


if __name__ == "__main__":
    key = jax.random.PRNGKey(0)
    k1, k2, k3 = jax.random.split(key, 3)

    B, N, M, D = 2, 128, 128, 256
    pred_points = jax.random.normal(k1, (B, N, 3), dtype=jnp.float32)
    target_points = jax.random.normal(k2, (B, M, 3), dtype=jnp.float32)
    densities = jax.random.normal(k3, (B, D), dtype=jnp.float32)

    out = combined_loss(pred_points, target_points, densities,
                        lambda_chamfer=1.0, lambda_density=0.1)
    out = jax.tree_util.tree_map(jax.block_until_ready, out)

    # Pure-JAX reference check (direct pairwise distances, no decomposition).
    d = jnp.sum(
        (pred_points[:, :, None, :] - target_points[:, None, :, :]) ** 2, axis=-1)
    cham_ref = jnp.mean(jnp.min(d, axis=2)) + jnp.mean(jnp.min(d, axis=1))
    dens_ref = jnp.mean(jnp.abs(densities))
    total_ref = 1.0 * cham_ref + 0.1 * dens_ref
    assert jnp.allclose(out["chamfer"], cham_ref, rtol=1e-4, atol=1e-4), (
        out["chamfer"], cham_ref)
    assert jnp.allclose(out["density"], dens_ref, rtol=1e-5, atol=1e-6)
    assert jnp.allclose(out["total"], total_ref, rtol=1e-4, atol=1e-4)

    # NaN guard: chamfer collapses to 0.0 if any input point is NaN.
    bad_pred = pred_points.at[0, 0, 0].set(jnp.nan)
    out_nan = combined_loss(bad_pred, target_points, densities)
    out_nan = jax.tree_util.tree_map(jax.block_until_ready, out_nan)
    assert jnp.allclose(out_nan["chamfer"], 0.0)
    assert jnp.allclose(out_nan["total"], 0.1 * dens_ref, rtol=1e-4, atol=1e-5)

    print("KERNEL_OK")
</pallas_src>

<mosaic_0001>
module attributes {stable_mosaic.version = 11 : i64} {
  func.func @_chamfer_kernel(%arg0: i32, %arg1: i32, %arg2: memref<1x3x128xf32, #tpu.memory_space<vmem>>, %arg3: memref<1x128x1xf32, #tpu.memory_space<vmem>>, %arg4: memref<1x3x128xf32, #tpu.memory_space<vmem>>, %arg5: memref<1x1x128xf32, #tpu.memory_space<vmem>>, %arg6: memref<1x128x128xf32, #tpu.memory_space<vmem>>, %arg7: memref<1x1x128xf32, #tpu.memory_space<vmem>>) attributes {dimension_semantics = [#tpu.dimension_semantics<parallel>, #tpu.dimension_semantics<arbitrary>], iteration_bounds = array<i64: 2, 1>, scalar_prefetch = 0 : i64, scratch_operands = 2 : i64, tpu.core_type = #tpu.core_type<tc>, window_params = [{transform_indices = @transform_0, window_bounds = array<i64: 1, 3, 128>}, {transform_indices = @transform_1, window_bounds = array<i64: 1, 128, 1>}, {transform_indices = @transform_2, window_bounds = array<i64: 1, 3, 128>}, {transform_indices = @transform_3, window_bounds = array<i64: 1, 1, 128>}]} {
    %c0_i32 = arith.constant 0 : i32
    %0 = arith.cmpi eq, %arg1, %c0_i32 : i32
    %1 = arith.extui %0 : i1 to i32
    %c0_i32_0 = arith.constant 0 : i32
    %2 = arith.cmpi ne, %1, %c0_i32_0 : i32
    scf.if %2 {
      %cst_30 = arith.constant 0x7F800000 : f32
      %50 = vector.broadcast %cst_30 : f32 to vector<1x128x128xf32>
      %c0_31 = arith.constant 0 : index
      %c0_32 = arith.constant 0 : index
      %c0_33 = arith.constant 0 : index
      %51 = vector.load %arg6[%c0_31, %c0_32, %c0_33] : memref<1x128x128xf32, #tpu.memory_space<vmem>>, vector<1x128x128xf32>
      tpu.vector_store %arg6[%c0_31, %c0_32, %c0_33], %50 {strides = array<i32>} : memref<1x128x128xf32, #tpu.memory_space<vmem>>, vector<1x128x128xf32>,
      %cst_34 = arith.constant 0.000000e+00 : f32
      %52 = vector.broadcast %cst_34 : f32 to vector<1x1x128xf32>
      %c0_35 = arith.constant 0 : index
      %c0_36 = arith.constant 0 : index
      %c0_37 = arith.constant 0 : index
      %53 = vector.load %arg7[%c0_35, %c0_36, %c0_37] : memref<1x1x128xf32, #tpu.memory_space<vmem>>, vector<1x1x128xf32>
      tpu.vector_store %arg7[%c0_35, %c0_36, %c0_37], %52 {strides = array<i32>} : memref<1x1x128xf32, #tpu.memory_space<vmem>>, vector<1x1x128xf32>,
    } else {
    }
    %c0 = arith.constant 0 : index
    %c0_1 = arith.constant 0 : index
    %c0_2 = arith.constant 0 : index
    %3 = vector.load %arg2[%c0, %c0_1, %c0_2] : memref<1x3x128xf32, #tpu.memory_space<vmem>>, vector<1x3x128xf32>
    %4 = vector.shape_cast %3 : vector<1x3x128xf32> to vector<3x128xf32>
    %c0_3 = arith.constant 0 : index
    %c0_4 = arith.constant 0 : index
    %c0_5 = arith.constant 0 : index
    %5 = vector.load %arg3[%c0_3, %c0_4, %c0_5] : memref<1x128x1xf32, #tpu.memory_space<vmem>>, vector<1x128x1xf32>
    %6 = vector.shape_cast %5 : vector<1x128x1xf32> to vector<128x1xf32>
    %c0_6 = arith.constant 0 : index
    %c0_7 = arith.constant 0 : index
    %c0_8 = arith.constant 0 : index
    %7 = vector.load %arg4[%c0_6, %c0_7, %c0_8] : memref<1x3x128xf32, #tpu.memory_space<vmem>>, vector<1x3x128xf32>
    %8 = vector.shape_cast %7 : vector<1x3x128xf32> to vector<3x128xf32>
    %9 = arith.mulf %8, %8 : vector<3x128xf32>
    %cst = arith.constant dense<0.000000e+00> : vector<128xf32>
    %10 = vector.multi_reduction <add>, %9, %cst [0] : vector<3x128xf32> to vector<128xf32>
    %11 = vector.shape_cast %10 : vector<128xf32> to vector<1x128xf32>
    %cst_9 = arith.constant -2.000000e+00 : f32
    %12 = vector.broadcast %cst_9 : f32 to vector<3x128xf32>
    %13 = arith.mulf %4, %12 : vector<3x128xf32>
    %cst_10 = arith.constant dense<0.000000e+00> : vector<128x128xf32>
    %14 = tpu.matmul %13, %8, %cst_10 {dimension_numbers = #tpu.dot_dimension_numbers<[0], [0], [1], [1], [0, 1, 1, 1], [], []>, precision = #tpu.contract_precision<fp32>} : vector<3x128xf32>, vector<3x128xf32>, vector<128x128xf32> -> vector<128x128xf32>
    %15 = vector.broadcast %11 : vector<1x128xf32> to vector<128x128xf32>
    %16 = arith.addf %15, %14 : vector<128x128xf32>
    %17 = vector.broadcast %6 : vector<128x1xf32> to vector<128x128xf32>
    %18 = arith.addf %17, %16 : vector<128x128xf32>
    %cst_11 = arith.constant 0.000000e+00 : f32
    %19 = vector.broadcast %cst_11 : f32 to vector<128x128xf32>
    %20 = arith.maximumf %18, %19 : vector<128x128xf32>
    %21 = vector.shape_cast %4 : vector<3x128xf32> to vector<1x3x128xf32>
    %cst_12 = arith.constant dense<0.000000e+00> : vector<1xf32>
    %22 = vector.multi_reduction <add>, %21, %cst_12 [1, 2] : vector<1x3x128xf32> to vector<1xf32>
    %23 = vector.shape_cast %22 : vector<1xf32> to vector<1x1x1xf32>
    %24 = vector.extract %23[0, 0, 0] : f32 from vector<1x1x1xf32>
    %25 = vector.shape_cast %8 : vector<3x128xf32> to vector<1x3x128xf32>
    %cst_13 = arith.constant dense<0.000000e+00> : vector<1xf32>
    %26 = vector.multi_reduction <add>, %25, %cst_13 [1, 2] : vector<1x3x128xf32> to vector<1xf32>
    %27 = vector.shape_cast %26 : vector<1xf32> to vector<1x1x1xf32>
    %28 = vector.extract %27[0, 0, 0] : f32 from vector<1x1x1xf32>
    %29 = arith.addf %24, %28 : f32
    %cst_14 = arith.constant 0.000000e+00 : f32
    %30 = arith.mulf %29, %cst_14 : f32
    %cst_15 = arith.constant dense<0x7F800000> : vector<128xf32>
    %31 = vector.multi_reduction <minimumf>, %20, %cst_15 [0] : vector<128x128xf32> to vector<128xf32>
    %32 = vector.shape_cast %31 : vector<128xf32> to vector<1x128xf32>
    %c0_16 = arith.constant 0 : index
    %c0_17 = arith.constant 0 : index
    %c0_18 = arith.constant 0 : index
    %33 = vector.load %arg7[%c0_16, %c0_17, %c0_18] : memref<1x1x128xf32, #tpu.memory_space<vmem>>, vector<1x1x128xf32>
    %34 = vector.shape_cast %33 : vector<1x1x128xf32> to vector<1x128xf32>
    %35 = arith.addf %34, %32 : vector<1x128xf32>
    %36 = vector.broadcast %30 : f32 to vector<1x128xf32>
    %37 = arith.addf %35, %36 : vector<1x128xf32>
    %c0_19 = arith.constant 0 : index
    %c0_20 = arith.constant 0 : index
    %c0_21 = arith.constant 0 : index
    %38 = vector.load %arg7[%c0_19, %c0_20, %c0_21] : memref<1x1x128xf32, #tpu.memory_space<vmem>>, vector<1x1x128xf32>
    %39 = vector.shape_cast %38 : vector<1x1x128xf32> to vector<1x128xf32>
    %40 = vector.shape_cast %37 : vector<1x128xf32> to vector<1x1x128xf32>
    tpu.vector_store %arg7[%c0_19, %c0_20, %c0_21], %40 {strides = array<i32>} : memref<1x1x128xf32, #tpu.memory_space<vmem>>, vector<1x1x128xf32>,
    %c0_22 = arith.constant 0 : index
    %c0_23 = arith.constant 0 : index
    %c0_24 = arith.constant 0 : index
    %41 = vector.load %arg6[%c0_22, %c0_23, %c0_24] : memref<1x128x128xf32, #tpu.memory_space<vmem>>, vector<1x128x128xf32>
    %42 = vector.shape_cast %41 : vector<1x128x128xf32> to vector<128x128xf32>
    %43 = arith.minimumf %42, %20 : vector<128x128xf32>
    %c0_25 = arith.constant 0 : index
    %c0_26 = arith.constant 0 : index
    %c0_27 = arith.constant 0 : index
    %44 = vector.load %arg6[%c0_25, %c0_26, %c0_27] : memref<1x128x128xf32, #tpu.memory_space<vmem>>, vector<1x128x128xf32>
    %45 = vector.shape_cast %44 : vector<1x128x128xf32> to vector<128x128xf32>
    %46 = vector.shape_cast %43 : vector<128x128xf32> to vector<1x128x128xf32>
    tpu.vector_store %arg6[%c0_25, %c0_26, %c0_27], %46 {strides = array<i32>} : memref<1x128x128xf32, #tpu.memory_space<vmem>>, vector<1x128x128xf32>,
    %c0_i32_28 = arith.constant 0 : i32
    %47 = arith.cmpi eq, %arg1, %c0_i32_28 : i32
    %48 = arith.extui %47 : i1 to i32
    %c0_i32_29 = arith.constant 0 : i32
    %49 = arith.cmpi ne, %48, %c0_i32_29 : i32
    scf.if %49 {
      %c0_30 = arith.constant 0 : index
      %c0_31 = arith.constant 0 : index
      %c0_32 = arith.constant 0 : index
      %50 = vector.load %arg6[%c0_30, %c0_31, %c0_32] : memref<1x128x128xf32, #tpu.memory_space<vmem>>, vector<1x128x128xf32>
      %51 = vector.shape_cast %50 : vector<1x128x128xf32> to vector<128x128xf32>
      %cst_33 = arith.constant dense<0x7F800000> : vector<128xf32>
      %52 = vector.multi_reduction <minimumf>, %51, %cst_33 [1] : vector<128x128xf32> to vector<128xf32>
      %53 = vector.shape_cast %52 : vector<128xf32> to vector<128x1xf32>
      %54 = vector.shape_cast %53 : vector<128x1xf32> to vector<1x128x1xf32>
      %cst_34 = arith.constant dense<0.000000e+00> : vector<1xf32>
      %55 = vector.multi_reduction <add>, %54, %cst_34 [1, 2] : vector<1x128x1xf32> to vector<1xf32>
      %56 = vector.shape_cast %55 : vector<1xf32> to vector<1x1x1xf32>
      %57 = vector.extract %56[0, 0, 0] : f32 from vector<1x1x1xf32>
      %c0_35 = arith.constant 0 : index
      %c0_36 = arith.constant 0 : index
      %c0_37 = arith.constant 0 : index
      %58 = vector.load %arg7[%c0_35, %c0_36, %c0_37] : memref<1x1x128xf32, #tpu.memory_space<vmem>>, vector<1x1x128xf32>
      %59 = vector.shape_cast %58 : vector<1x1x128xf32> to vector<1x128xf32>
      %60 = vector.shape_cast %59 : vector<1x128xf32> to vector<1x1x128xf32>
      %cst_38 = arith.constant dense<0.000000e+00> : vector<1xf32>
      %61 = vector.multi_reduction <add>, %60, %cst_38 [1, 2] : vector<1x1x128xf32> to vector<1xf32>
      %62 = vector.shape_cast %61 : vector<1xf32> to vector<1x1x1xf32>
      %63 = vector.extract %62[0, 0, 0] : f32 from vector<1x1x1xf32>
      %cst_39 = arith.constant 7.812500e-03 : f32
      %64 = arith.mulf %57, %cst_39 : f32
      %cst_40 = arith.constant 7.812500e-03 : f32
      %65 = arith.mulf %63, %cst_40 : f32
      %66 = arith.addf %64, %65 : f32
      %67 = vector.broadcast %66 : f32 to vector<1x128xf32>
      %c0_41 = arith.constant 0 : index
      %c0_42 = arith.constant 0 : index
      %c0_43 = arith.constant 0 : index
      %68 = vector.load %arg5[%c0_41, %c0_42, %c0_43] : memref<1x1x128xf32, #tpu.memory_space<vmem>>, vector<1x1x128xf32>
      %69 = vector.shape_cast %68 : vector<1x1x128xf32> to vector<1x128xf32>
      %70 = vector.shape_cast %67 : vector<1x128xf32> to vector<1x1x128xf32>
      tpu.vector_store %arg5[%c0_41, %c0_42, %c0_43], %70 {strides = array<i32>} : memref<1x1x128xf32, #tpu.memory_space<vmem>>, vector<1x1x128xf32>,
    } else {
    }
    return
  }
  func.func @transform_0(%arg0: i32, %arg1: i32) -> (i32, i32, i32) {
    %c0_i32 = arith.constant 0 : i32
    %c0_i32_0 = arith.constant 0 : i32
    %c0_i32_1 = arith.constant 0 : i32
    return %arg0, %c0_i32, %c0_i32_0 : i32, i32, i32
  }
  func.func @transform_1(%arg0: i32, %arg1: i32) -> (i32, i32, i32) {
    %c0_i32 = arith.constant 0 : i32
    %c0_i32_0 = arith.constant 0 : i32
    %c0_i32_1 = arith.constant 0 : i32
    return %arg0, %c0_i32, %c0_i32_0 : i32, i32, i32
  }
  func.func @transform_2(%arg0: i32, %arg1: i32) -> (i32, i32, i32) {
    %c0_i32 = arith.constant 0 : i32
    %c0_i32_0 = arith.constant 0 : i32
    return %arg0, %c0_i32, %arg1 : i32, i32, i32
  }
  func.func @transform_3(%arg0: i32, %arg1: i32) -> (i32, i32, i32) {
    %c0_i32 = arith.constant 0 : i32
    %c0_i32_0 = arith.constant 0 : i32
    %c0_i32_1 = arith.constant 0 : i32
    return %arg0, %c0_i32, %c0_i32_0 : i32, i32, i32
  }
}

</mosaic_0001>

<llo_original>
// kernel: tpu_custom_call.1
$region0: #{tpu_custom_call.1}
  #allocation0 [shape = 'u32[]', space=smem, size = 0x4, offset = 0x4, fixed_abs, tag = 'smem constant byte address 0x4 - core index']
  #allocation1 [shape = 'u32[144,128]{1,0:T(1,128)}', space=vmem, size = 0x12000, scoped, tag = 'internal scratch']
  #allocation2 [shape = 'f32[1,128,128]{2,1,0:T(8,128)}', space=vmem, size = 0x10000, scoped, tag = 'scratch operand']
  #allocation3 [shape = 'f32[1,1,128]{2,1,0:T(1,128)}', space=vmem, size = 0x200, scoped, tag = 'scratch operand']
  %s0 = inlined_call_operand.vmem [shape: f32[2,3,128], index: 0, kind: input, shape index: {}]
  %s1 = inlined_call_operand.vmem [shape: f32[2,128,1], index: 1, kind: input, shape index: {}]
  %s2 = inlined_call_operand.vmem [shape: f32[2,3,128], index: 2, kind: input, shape index: {}]
  %s3 = inlined_call_operand.hbm [shape: f32[2,1,128], index: 3, kind: output, shape index: {}]
  %s4 = sld [smem:[#allocation0]]
  $region53: #{tpu_custom_call.1} parent=0
    _
  %s6 = ssub.s32 1, %s4
  %s7 = scalar_select 0, %s6, %s4
  $region1: #{tpu_custom_call.1} parent=0
    #allocation4 [shape = 'u8[1024]{0}', space=vmem, size = 0x400, scoped, tag = 'output window, operand 0']
    #allocation5 [shape = 's32[2]{0}', space=sflag, size = 0x8, scoped, tag = 'scoped memory for tpu_custom_call.1']
    %8 = vsyncpa [#allocation5], 0
    %s9 = scalar_lea.sflag [#allocation5], 1
    %10 = vsyncpa %s9, 0
    loop: start=0, step=1, limit=4
    $region2: #{tpu_custom_call.1} parent=1 // loop_pre_header
      _
    $region3: #{tpu_custom_call.1} parent=1 // loop_header
      %s12 = sphi 0, %s16
      %p13 = scmp.ge.s32.totalorder %s12, 4
      %s19 = sphi 0, %s31
      %s20 = sphi 0, %s27
      %s21 = sphi 0, %s19
      %s22 = sphi 0, %s20
      %s23 = sphi 0, %s21
      %s24 = sphi 0, %s22
      %s34 = sphi 0, %s36
      %s37 = sphi 0, %s34
      %s38 = sphi 0, %s37
      %s54 = sphi 0, %s38
      %s60 = sphi 0, %s62
      %s63 = sphi 0, %s60
      %s64 = sphi 0, %s63
      %s80 = sphi 0, %s64
      %s88 = sphi 0, %s90
      %s91 = sphi 0, %s88
      %s92 = sphi 0, %s91
      %s108 = sphi 0, %s92
      %s114 = sphi 0, %s116
      %s117 = sphi 0, %s114
      %s118 = sphi 0, %s117
      %s134 = sphi 0, %s118
    $region4: #{tpu_custom_call.1} parent=1 // loop_header_branch
      %15 = sbr.rel (%p13) target = $region8
    $region5: #{tpu_custom_call.1} parent=1 // loop_body
      %s17 = ssub.s32 %s12, 1
      %s18 = ssub.s32 %s12, 2
      %s25 = sadd.s32 1, %s20
      %p26 = scmp.ge.s32.totalorder %s25, 1
      %s27 = scalar_select %p26, 0, %s25
      %s28 = sadd.s32 1, %s19
      %s29 = scalar_select %p26, %s28, %s19
      %p30 = scmp.ge.s32.totalorder %s29, 2
      %s31 = scalar_select %p30, 0, %s29
      %s32 = ssub.s32 %s19, %s31
      %p33 = scmp.eq.s32.totalorder %s32, 0
      %s35 = sadd.s32 %s34, 1
      %s36 = scalar_select %p33, %s34, %s35
      %p39 = pneg %p33
      %p40 = scmp.eq.s32.totalorder %s12, 1
      %p41 = por %p39, %p40
      %p42 = scmp.ne.s32.totalorder %s34, %s37
      %p43 = scmp.eq.s32.totalorder %s12, 0
      %p44 = por %p42, %p43
      %p45 = scmp.ne.s32.totalorder %s34, %s37
      %p46 = scmp.eq.s32.totalorder %s17, 1
      %p47 = por %p45, %p46
      %p48 = scmp.ne.s32.totalorder %s37, %s38
      %p49 = scmp.eq.s32.totalorder %s17, 0
      %p50 = por %p48, %p49
      %p51 = scmp.ne.s32.totalorder %s37, %s38
      %p52 = scmp.eq.s32.totalorder %s18, 1
      %p53 = por %p51, %p52
      %p55 = scmp.ne.s32.totalorder %s38, %s54
      %p56 = scmp.eq.s32.totalorder %s18, 0
      %p57 = por %p55, %p56
      %s58 = ssub.s32 %s19, %s31
      %p59 = scmp.eq.s32.totalorder %s58, 0
      %s61 = sadd.s32 %s60, 1
      %s62 = scalar_select %p59, %s60, %s61
      %p65 = pneg %p59
      %p66 = scmp.eq.s32.totalorder %s12, 1
      %p67 = por %p65, %p66
      %p68 = scmp.ne.s32.totalorder %s60, %s63
      %p69 = scmp.eq.s32.totalorder %s12, 0
      %p70 = por %p68, %p69
      %p71 = scmp.ne.s32.totalorder %s60, %s63
      %p72 = scmp.eq.s32.totalorder %s17, 1
      %p73 = por %p71, %p72
      %p74 = scmp.ne.s32.totalorder %s63, %s64
      %p75 = scmp.eq.s32.totalorder %s17, 0
      %p76 = por %p74, %p75
      %p77 = scmp.ne.s32.totalorder %s63, %s64
      %p78 = scmp.eq.s32.totalorder %s18, 1
      %p79 = por %p77, %p78
      %p81 = scmp.ne.s32.totalorder %s64, %s80
      %p82 = scmp.eq.s32.totalorder %s18, 0
      %p83 = por %p81, %p82
      %s84 = ssub.s32 %s19, %s31
      %s85 = ssub.s32 %s20, %s27
      %s86 = sor.u32 %s84, %s85
      %p87 = scmp.eq.s32.totalorder %s86, 0
      %s89 = sadd.s32 %s88, 1
      %s90 = scalar_select %p87, %s88, %s89
      %p93 = pneg %p87
      %p94 = scmp.eq.s32.totalorder %s12, 1
      %p95 = por %p93, %p94
      %p96 = scmp.ne.s32.totalorder %s88, %s91
      %p97 = scmp.eq.s32.totalorder %s12, 0
      %p98 = por %p96, %p97
      %p99 = scmp.ne.s32.totalorder %s88, %s91
      %p100 = scmp.eq.s32.totalorder %s17, 1
      %p101 = por %p99, %p100
      %p102 = scmp.ne.s32.totalorder %s91, %s92
      %p103 = scmp.eq.s32.totalorder %s17, 0
      %p104 = por %p102, %p103
      %p105 = scmp.ne.s32.totalorder %s91, %s92
      %p106 = scmp.eq.s32.totalorder %s18, 1
      %p107 = por %p105, %p106
      %p109 = scmp.ne.s32.totalorder %s92, %s108
      %p110 = scmp.eq.s32.totalorder %s18, 0
      %p111 = por %p109, %p110
      %s112 = ssub.s32 %s19, %s31
      %p113 = scmp.eq.s32.totalorder %s112, 0
      %s115 = sadd.s32 %s114, 1
      %s116 = scalar_select %p113, %s114, %s115
      %p119 = pneg %p113
      %p120 = scmp.eq.s32.totalorder %s12, 1
      %p121 = por %p119, %p120
      %p122 = scmp.ne.s32.totalorder %s114, %s117
      %p123 = scmp.eq.s32.totalorder %s12, 0
      %p124 = por %p122, %p123
      %p125 = scmp.ne.s32.totalorder %s114, %s117
      %p126 = scmp.eq.s32.totalorder %s17, 1
      %p127 = por %p125, %p126
      %p128 = scmp.ne.s32.totalorder %s117, %s118
      %p129 = scmp.eq.s32.totalorder %s17, 0
      %p130 = por %p128, %p129
      %p131 = scmp.ne.s32.totalorder %s117, %s118
      %p132 = scmp.eq.s32.totalorder %s18, 1
      %p133 = por %p131, %p132
      %p135 = scmp.ne.s32.totalorder %s118, %s134
      %p136 = scmp.eq.s32.totalorder %s18, 0
      %p137 = por %p135, %p136
      %p138 = scmp.le.s32.totalorder 1, %s12
      %p139 = scmp.lt.s32.totalorder %s12, 3
      %p140 = pnand %p138, %p139
      %p141 = pneg %p140
      // Predicated region
      $region9: #{tpu_custom_call.1} parent=5 // pred_check
        _
      $region10: #{tpu_custom_call.1} parent=5 // pred_check_branch
        %143 = sbr.rel (%p140) target = $region12
      $region11: #{tpu_custom_call.1} parent=5 // pred_region
        %s144 = ssub.s32 %s12, 1
      $region12: #{tpu_custom_call.1} parent=5 // pred_fallthru
        _
      %p145 = scmp.lt.s32.totalorder %s12, 2
      // Predicated region
      $region13: #{tpu_custom_call.1} parent=5 // pred_check
        %p146 = pneg %p145
      $region14: #{tpu_custom_call.1} parent=5 // pred_check_branch
        %148 = sbr.rel (%p146) target = $region16
      $region15: #{tpu_custom_call.1} parent=5 // pred_region
        // Predicated region
        $region17: #{tpu_custom_call.1} parent=15 // pred_check
          %p149 = pneg %p44
        $region18: #{tpu_custom_call.1} parent=15 // pred_check_branch
          %151 = sbr.rel (%p149) target = $region20
        $region19: #{tpu_custom_call.1} parent=15 // pred_region
          %p152 = scmp.lt.s32.totalorder %s19, 1
          %s153 = scalar_select %p152, %s19, 1
          %s154 = smul.addr %s153, 4
          %s155 = scalar_lea.vmem %s0, %s154
        $region20: #{tpu_custom_call.1} parent=15 // pred_fallthru
          _
        // Predicated region
        $region21: #{tpu_custom_call.1} parent=15 // pred_check
          %p156 = pneg %p70
        $region22: #{tpu_custom_call.1} parent=15 // pred_check_branch
          %158 = sbr.rel (%p156) target = $region24
        $region23: #{tpu_custom_call.1} parent=15 // pred_region
          %p159 = scmp.lt.s32.totalorder %s19, 1
          %s160 = scalar_select %p159, %s19, 1
          %s161 = smul.addr %s160, 16
          %s162 = smul.addr %s161, 8
          %s163 = scalar_lea.vmem %s1, %s162
        $region24: #{tpu_custom_call.1} parent=15 // pred_fallthru
          _
        // Predicated region
        $region25: #{tpu_custom_call.1} parent=15 // pred_check
          %p164 = pneg %p98
        $region26: #{tpu_custom_call.1} parent=15 // pred_check_branch
          %166 = sbr.rel (%p164) target = $region28
        $region27: #{tpu_custom_call.1} parent=15 // pred_region
          %p167 = scmp.lt.s32.totalorder %s19, 1
          %s168 = scalar_select %p167, %s19, 1
          %p169 = scmp.lt.s32.totalorder %s20, 0
          %s170 = scalar_select %p169, %s20, 0
          %s171 = sadd.s32 %s170, %s168
          %s172 = smul.addr %s171, 4
          %s173 = scalar_lea.vmem %s2, %s172
        $region28: #{tpu_custom_call.1} parent=15 // pred_fallthru
          _
      $region16: #{tpu_custom_call.1} parent=5 // pred_fallthru
        _
      %p174 = scmp.le.s32.totalorder 1, %s12
      %p175 = scmp.lt.s32.totalorder %s12, 3
      %p176 = pnand %p174, %p175
      %p177 = pneg %p176
      // Predicated region
      $region29: #{tpu_custom_call.1} parent=5 // pred_check
        _
      $region30: #{tpu_custom_call.1} parent=5 // pred_check_branch
        %179 = sbr.rel (%p176) target = $region32
      $region31: #{tpu_custom_call.1} parent=5 // pred_region
        %s180 = ssub.s32 %s12, 1
        %p181 = scmp.lt.s32.totalorder %s21, 1
        %s182 = scalar_select %p181, %s21, 1
        %s183 = smul.addr %s182, 4
        %s184 = scalar_lea.vmem %s0, %s183
        %p185 = pneg %p50
        %p186 = pneg %p47
        %p187 = scmp.lt.s32.totalorder %s21, 1
        %s188 = scalar_select %p187, %s21, 1
        %s189 = smul.addr %s188, 16
        %s190 = smul.addr %s189, 8
        %s191 = scalar_lea.vmem %s1, %s190
        %p192 = pneg %p76
        %p193 = pneg %p73
        %p194 = scmp.lt.s32.totalorder %s21, 1
        %s195 = scalar_select %p194, %s21, 1
        %p196 = scmp.lt.s32.totalorder %s22, 0
        %s197 = scalar_select %p196, %s22, 0
        %s198 = sadd.s32 %s197, %s195
        %s199 = smul.addr %s198, 4
        %s200 = scalar_lea.vmem %s2, %s199
        %p201 = pneg %p104
        %p202 = pneg %p101
        %p203 = pneg %p130
        %p204 = pneg %p127
        %s205 = sand.u32 %s117, 1
        %s206 = scalar_lea.sflag [#allocation5], %s205
        %s207 = sand.u32 %s117, 1
        %s208 = scalar_lea.vmem [#allocation4], %s207
        %p209 = scmp.lt.s32.totalorder %s21, 1
        %s210 = scalar_select %p209, %s21, 1
        %s211 = smul.addr %s210, 4
        %s212 = scalar_lea.vmem %s0, %s211
        %p213 = scmp.lt.s32.totalorder %s21, 1
        %s214 = scalar_select %p213, %s21, 1
        %s215 = smul.addr %s214, 16
        %s216 = smul.addr %s215, 8
        %s217 = scalar_lea.vmem %s1, %s216
        %p218 = scmp.lt.s32.totalorder %s21, 1
        %s219 = scalar_select %p218, %s21, 1
        %p220 = scmp.lt.s32.totalorder %s22, 0
        %s221 = scalar_select %p220, %s22, 0
        %s222 = sadd.s32 %s221, %s219
        %s223 = smul.addr %s222, 4
        %s224 = scalar_lea.vmem %s2, %s223
        %p225 = scmp.eq.s32.totalorder %s22, 0
        // Predicated region
        $region33: #{tpu_custom_call.1} parent=31 // pred_check
          %p226 = pneg %p225
        $region34: #{tpu_custom_call.1} parent=31 // pred_check_branch
          %228 = sbr.rel (%p226) target = $region36
        $region35: #{tpu_custom_call.1} parent=31 // pred_region
          %229 = vst [vmem:[#allocation2] sm:$0xff] inf
          %230 = vst [vmem:[#allocation2 + $0x8] sm:$0xff] inf
          %231 = vst [vmem:[#allocation2 + $0x10] sm:$0xff] inf
          %232 = vst [vmem:[#allocation2 + $0x18] sm:$0xff] inf
          %233 = vst [vmem:[#allocation2 + $0x20] sm:$0xff] inf
          %234 = vst [vmem:[#allocation2 + $0x28] sm:$0xff] inf
          %235 = vst [vmem:[#allocation2 + $0x30] sm:$0xff] inf
          %236 = vst [vmem:[#allocation2 + $0x38] sm:$0xff] inf
          %237 = vst [vmem:[#allocation2 + $0x40] sm:$0xff] inf
          %238 = vst [vmem:[#allocation2 + $0x48] sm:$0xff] inf
          %239 = vst [vmem:[#allocation2 + $0x50] sm:$0xff] inf
          %240 = vst [vmem:[#allocation2 + $0x58] sm:$0xff] inf
          %241 = vst [vmem:[#allocation2 + $0x60] sm:$0xff] inf
          %242 = vst [vmem:[#allocation2 + $0x68] sm:$0xff] inf
          %243 = vst [vmem:[#allocation2 + $0x70] sm:$0xff] inf
          %244 = vst [vmem:[#allocation2 + $0x78] sm:$0xff] inf
          %245 = vst [vmem:[#allocation3] sm:$0x1] 0.0
        $region36: #{tpu_custom_call.1} parent=31 // pred_fallthru
          _
        %v246 = vld [vmem:[%s212] sm:$0x7]
        %v247 = vld [vmem:[%s217] sm:$0xff]
        %v248 = vld [vmem:[%s217 + $0x8] sm:$0xff]
        %v249 = vld [vmem:[%s217 + $0x10] sm:$0xff]
        %v250 = vld [vmem:[%s217 + $0x18] sm:$0xff]
        %v251 = vld [vmem:[%s217 + $0x20] sm:$0xff]
        %v252 = vld [vmem:[%s217 + $0x28] sm:$0xff]
        %v253 = vld [vmem:[%s217 + $0x30] sm:$0xff]
        %v254 = vld [vmem:[%s217 + $0x38] sm:$0xff]
        %v255 = vld [vmem:[%s217 + $0x40] sm:$0xff]
        %v256 = vld [vmem:[%s217 + $0x48] sm:$0xff]
        %v257 = vld [vmem:[%s217 + $0x50] sm:$0xff]
        %v258 = vld [vmem:[%s217 + $0x58] sm:$0xff]
        %v259 = vld [vmem:[%s217 + $0x60] sm:$0xff]
        %v260 = vld [vmem:[%s217 + $0x68] sm:$0xff]
        %v261 = vld [vmem:[%s217 + $0x70] sm:$0xff]
        %v262 = vld [vmem:[%s217 + $0x78] sm:$0xff]
        %v263 = vld [vmem:[%s224] sm:$0x7]
        %v264 = vmul.f32 %v263, %v263
        %vm265 = vcmask 1042432
        %v266 = vsel %vm265, %v264, 0.0
        %v267 = vrot.slane %v266, 4
        %v268 = vadd.f32 %v266, %v267
        %v269 = vrot.slane %v268, 2
        %v270 = vadd.f32 %v268, %v269
        %v271 = vrot.slane %v270, 1
        %v272 = vadd.f32 %v270, %v271
        %v273 = vmul.f32 %v246, -2.0
        %274 = vxpose.xlu0.b32.start [1/16] %v273, 128
        %275 = vxpose.xlu0.b32.cont [2/16] 0.0, 128
        %276 = vxpose.xlu0.b32.cont [3/16] 0.0, 128
        %277 = vxpose.xlu0.b32.cont [4/16] 0.0, 128
        %278 = vxpose.xlu0.b32.cont [5/16] 0.0, 128
        %279 = vxpose.xlu0.b32.cont [6/16] 0.0, 128
        %280 = vxpose.xlu0.b32.cont [7/16] 0.0, 128
        %281 = vxpose.xlu0.b32.cont [8/16] 0.0, 128
        %282 = vxpose.xlu0.b32.cont [9/16] 0.0, 128
        %283 = vxpose.xlu0.b32.cont [10/16] 0.0, 128
        %284 = vxpose.xlu0.b32.cont [11/16] 0.0, 128
        %285 = vxpose.xlu0.b32.cont [12/16] 0.0, 128
        %286 = vxpose.xlu0.b32.cont [13/16] 0.0, 128
        %287 = vxpose.xlu0.b32.cont [14/16] 0.0, 128
        %288 = vxpose.xlu0.b32.cont [15/16] 0.0, 128
        %289 = vxpose.xlu0.b32.end [16/16] 0.0, 128
        %v290 = vpop.trf.xlu0
        %v291 = vpop.trf.xlu0
        %v292 = vpop.trf.xlu0
        %v293 = vpop.trf.xlu0
        %v294 = vpop.trf.xlu0
        %v295 = vpop.trf.xlu0
        %v296 = vpop.trf.xlu0
        %v297 = vpop.trf.xlu0
        %v298 = vpop.trf.xlu0
        %v299 = vpop.trf.xlu0
        %v300 = vpop.trf.xlu0
        %v301 = vpop.trf.xlu0
        %v302 = vpop.trf.xlu0
        %v303 = vpop.trf.xlu0
        %v304 = vpop.trf.xlu0
        %v305 = vpop.trf.xlu0
        %vm306 = vcmask 23552
        %v308 = vsel %vm306, %v290, 0
        %v311 = vsel %vm306, %v291, 0
        %v314 = vsel %vm306, %v292, 0
        %v317 = vsel %vm306, %v293, 0
        %v320 = vsel %vm306, %v294, 0
        %v323 = vsel %vm306, %v295, 0
        %v326 = vsel %vm306, %v296, 0
        %v329 = vsel %vm306, %v297, 0
        %v332 = vsel %vm306, %v298, 0
        %v335 = vsel %vm306, %v299, 0
        %v338 = vsel %vm306, %v300, 0
        %v341 = vsel %vm306, %v301, 0
        %v344 = vsel %vm306, %v302, 0
        %v347 = vsel %vm306, %v303, 0
        %v350 = vsel %vm306, %v304, 0
        %v353 = vsel %vm306, %v305, 0
        %v356 = vsel %vm265, %v263, 0
        %358 = vmatprep.subr.mxu0 0.0
        %v359 = vand.u32 %v356, 4294901760
        %360 = vmatpush1.msra.mxu0 %v359
        %361 = vmatprep.subr.mxu0 0.0
        %362 = vmatpush1.msra.mxu0 0.0
        %363 = vmatprep.subr.mxu0 0.0
        %364 = vmatpush1.msra.mxu0 0.0
        %365 = vmatprep.subr.mxu0 0.0
        %366 = vmatpush1.msra.mxu0 0.0
        %367 = vmatprep.subr.mxu0 0.0
        %368 = vmatpush1.msra.mxu0 0.0
        %369 = vmatprep.subr.mxu0 0.0
        %370 = vmatpush1.msra.mxu0 0.0
        %371 = vmatprep.subr.mxu0 0.0
        %372 = vmatpush1.msra.mxu0 0.0
        %373 = vmatprep.subr.mxu0 0.0
        %374 = vmatpush1.msra.mxu0 0.0
        %375 = vmatprep.subr.mxu0 0.0
        %376 = vmatpush1.msra.mxu0 0.0
        %377 = vmatprep.subr.mxu0 0.0
        %378 = vmatpush1.msra.mxu0 0.0
        %379 = vmatprep.subr.mxu0 0.0
        %380 = vmatpush1.msra.mxu0 0.0
        %381 = vmatprep.subr.mxu0 0.0
        %382 = vmatpush1.msra.mxu0 0.0
        %383 = vmatprep.subr.mxu0 0.0
        %384 = vmatpush1.msra.mxu0 0.0
        %385 = vmatprep.subr.mxu0 0.0
        %386 = vmatpush1.msra.mxu0 0.0
        %387 = vmatprep.subr.mxu0 0.0
        %388 = vmatpush1.msra.mxu0 0.0
        %389 = vmatprep.subr.mxu0 0.0
        %390 = vmatpush1.msra.mxu0 0.0
        %391 = vmatprep.subr.mxu0 0.0
        %392 = vmatpush1.msra.mxu0 0.0
        %393 = vmatprep.subr.mxu0 0.0
        %394 = vmatpush1.msra.mxu0 0.0
        %395 = vmatprep.subr.mxu0 0.0
        %396 = vmatpush1.msra.mxu0 0.0
        %397 = vmatprep.subr.mxu0 0.0
        %398 = vmatpush1.msra.mxu0 0.0
        %399 = vmatprep.subr.mxu0 0.0
        %400 = vmatpush1.msra.mxu0 0.0
        %401 = vmatprep.subr.mxu0 0.0
        %402 = vmatpush1.msra.mxu0 0.0
        %403 = vmatprep.subr.mxu0 0.0
        %404 = vmatpush1.msra.mxu0 0.0
        %405 = vmatprep.subr.mxu0 0.0
        %406 = vmatpush1.msra.mxu0 0.0
        %407 = vmatprep.subr.mxu0 0.0
        %408 = vmatpush1.msra.mxu0 0.0
        %409 = vmatprep.subr.mxu0 0.0
        %410 = vmatpush1.msra.mxu0 0.0
        %411 = vmatprep.subr.mxu0 0.0
        %412 = vmatpush1.msra.mxu0 0.0
        %413 = vmatprep.subr.mxu0 0.0
        %414 = vmatpush1.msra.mxu0 0.0
        %415 = vmatprep.subr.mxu0 0.0
        %416 = vmatpush1.msra.mxu0 0.0
        %417 = vmatprep.subr.mxu0 0.0
        %418 = vmatpush1.msra.mxu0 0.0
        %419 = vmatprep.subr.mxu0 0.0
        %420 = vmatpush1.msra.mxu0 0.0
        %421 = vmatprep.subr.mxu0 0.0
        %422 = vmatpush1.msra.mxu0 0.0
        %423 = vmatprep.mubr.f32.mxu0 0.0
        %v424 = vand.u32 %v308, 4294901760
        %v425 = vsub.f32 %v308, %v424
        %v426 = vand.u32 %v425, 4294901760
        %v427 = vsub.f32 %v425, %v426
        %v428 = vand.u32 %v427, 4294901760
        %429 = vmatmul.mubr.f32.gmra.mrb[0].mxu0 %v428
        %v430 = vpop.f32.mrb[0].mxu0
        %v431 = vadd.f32 0.0, %v430
        %v432 = vpop.f32.mrb[0].mxu0
        %433 = vmatprep.mubr.f32.mxu0 0.0
        %v434 = vand.u32 %v311, 4294901760
        %v435 = vsub.f32 %v311, %v434
        %v436 = vand.u32 %v435, 4294901760
        %v437 = vsub.f32 %v435, %v436
        %v438 = vand.u32 %v437, 4294901760
        %439 = vmatmul.mubr.f32.gmra.mrb[0].mxu0 %v438
        %v440 = vpop.f32.mrb[0].mxu0
        %v441 = vadd.f32 0.0, %v440
        %v442 = vpop.f32.mrb[0].mxu0
        %443 = vmatprep.mubr.f32.mxu0 0.0
        %v444 = vand.u32 %v314, 4294901760
        %v445 = vsub.f32 %v314, %v444
        %v446 = vand.u32 %v445, 4294901760
        %v447 = vsub.f32 %v445, %v446
        %v448 = vand.u32 %v447, 4294901760
        %449 = vmatmul.mubr.f32.gmra.mrb[0].mxu0 %v448
        %v450 = vpop.f32.mrb[0].mxu0
        %v451 = vadd.f32 0.0, %v450
        %v452 = vpop.f32.mrb[0].mxu0
        %453 = vmatprep.mubr.f32.mxu0 0.0
        %v454 = vand.u32 %v317, 4294901760
        %v455 = vsub.f32 %v317, %v454
        %v456 = vand.u32 %v455, 4294901760
        %v457 = vsub.f32 %v455, %v456
        %v458 = vand.u32 %v457, 4294901760
        %459 = vmatmul.mubr.f32.gmra.mrb[0].mxu0 %v458
        %v460 = vpop.f32.mrb[0].mxu0
        %v461 = vadd.f32 0.0, %v460
        %v462 = vpop.f32.mrb[0].mxu0
        %463 = vmatprep.mubr.f32.mxu0 0.0
        %v464 = vand.u32 %v320, 4294901760
        %v465 = vsub.f32 %v320, %v464
        %v466 = vand.u32 %v465, 4294901760
        %v467 = vsub.f32 %v465, %v466
        %v468 = vand.u32 %v467, 4294901760
        %469 = vmatmul.mubr.f32.gmra.mrb[0].mxu0 %v468
        %v470 = vpop.f32.mrb[0].mxu0
        %v471 = vadd.f32 0.0, %v470
        %v472 = vpop.f32.mrb[0].mxu0
        %473 = vmatprep.mubr.f32.mxu0 0.0
        %v474 = vand.u32 %v323, 4294901760
        %v475 = vsub.f32 %v323, %v474
        %v476 = vand.u32 %v475, 4294901760
        %v477 = vsub.f32 %v475, %v476
        %v478 = vand.u32 %v477, 4294901760
        %479 = vmatmul.mubr.f32.gmra.mrb[0].mxu0 %v478
        %v480 = vpop.f32.mrb[0].mxu0
        %v481 = vadd.f32 0.0, %v480
        %v482 = vpop.f32.mrb[0].mxu0
        %483 = vmatprep.mubr.f32.mxu0 0.0
        %v484 = vand.u32 %v326, 4294901760
        %v485 = vsub.f32 %v326, %v484
        %v486 = vand.u32 %v485, 4294901760
        %v487 = vsub.f32 %v485, %v486
        %v488 = vand.u32 %v487, 4294901760
        %489 = vmatmul.mubr.f32.gmra.mrb[0].mxu0 %v488
        %v490 = vpop.f32.mrb[0].mxu0
        %v491 = vadd.f32 0.0, %v490
        %v492 = vpop.f32.mrb[0].mxu0
        %493 = vmatprep.mubr.f32.mxu0 0.0
        %v494 = vand.u32 %v329, 4294901760
        %v495 = vsub.f32 %v329, %v494
        %v496 = vand.u32 %v495, 4294901760
        %v497 = vsub.f32 %v495, %v496
        %v498 = vand.u32 %v497, 4294901760
        %499 = vmatmul.mubr.f32.gmra.mrb[0].mxu0 %v498
        %v500 = vpop.f32.mrb[0].mxu0
        %v501 = vadd.f32 0.0, %v500
        %v502 = vpop.f32.mrb[0].mxu0
        %503 = vmatprep.mubr.f32.mxu0 0.0
        %v504 = vand.u32 %v332, 4294901760
        %v505 = vsub.f32 %v332, %v504
        %v506 = vand.u32 %v505, 4294901760
        %v507 = vsub.f32 %v505, %v506
        %v508 = vand.u32 %v507, 4294901760
        %509 = vmatmul.mubr.f32.gmra.mrb[0].mxu0 %v508
        %v510 = vpop.f32.mrb[0].mxu0
        %v511 = vadd.f32 0.0, %v510
        %v512 = vpop.f32.mrb[0].mxu0
        %513 = vmatprep.mubr.f32.mxu0 0.0
        %v514 = vand.u32 %v335, 4294901760
        %v515 = vsub.f32 %v335, %v514
        %v516 = vand.u32 %v515, 4294901760
        %v517 = vsub.f32 %v515, %v516
        %v518 = vand.u32 %v517, 4294901760
        %519 = vmatmul.mubr.f32.gmra.mrb[0].mxu0 %v518
        %v520 = vpop.f32.mrb[0].mxu0
        %v521 = vadd.f32 0.0, %v520
        %v522 = vpop.f32.mrb[0].mxu0
        %523 = vmatprep.mubr.f32.mxu0 0.0
        %v524 = vand.u32 %v338, 4294901760
        %v525 = vsub.f32 %v338, %v524
        %v526 = vand.u32 %v525, 4294901760
        %v527 = vsub.f32 %v525, %v526
        %v528 = vand.u32 %v527, 4294901760
        %529 = vmatmul.mubr.f32.gmra.mrb[0].mxu0 %v528
        %v530 = vpop.f32.mrb[0].mxu0
        %v531 = vadd.f32 0.0, %v530
        %v532 = vpop.f32.mrb[0].mxu0
        %533 = vmatprep.mubr.f32.mxu0 0.0
        %v534 = vand.u32 %v341, 4294901760
        %v535 = vsub.f32 %v341, %v534
        %v536 = vand.u32 %v535, 4294901760
        %v537 = vsub.f32 %v535, %v536
        %v538 = vand.u32 %v537, 4294901760
        %539 = vmatmul.mubr.f32.gmra.mrb[0].mxu0 %v538
        %v540 = vpop.f32.mrb[0].mxu0
        %v541 = vadd.f32 0.0, %v540
        %v542 = vpop.f32.mrb[0].mxu0
        %543 = vmatprep.mubr.f32.mxu0 0.0
        %v544 = vand.u32 %v344, 4294901760
        %v545 = vsub.f32 %v344, %v544
        %v546 = vand.u32 %v545, 4294901760
        %v547 = vsub.f32 %v545, %v546
        %v548 = vand.u32 %v547, 4294901760
        %549 = vmatmul.mubr.f32.gmra.mrb[0].mxu0 %v548
        %v550 = vpop.f32.mrb[0].mxu0
        %v551 = vadd.f32 0.0, %v550
        %v552 = vpop.f32.mrb[0].mxu0
        %553 = vmatprep.mubr.f32.mxu0 0.0
        %v554 = vand.u32 %v347, 4294901760
        %v555 = vsub.f32 %v347, %v554
        %v556 = vand.u32 %v555, 4294901760
        %v557 = vsub.f32 %v555, %v556
        %v558 = vand.u32 %v557, 4294901760
        %559 = vmatmul.mubr.f32.gmra.mrb[0].mxu0 %v558
        %v560 = vpop.f32.mrb[0].mxu0
        %v561 = vadd.f32 0.0, %v560
        %v562 = vpop.f32.mrb[0].mxu0
        %563 = vmatprep.mubr.f32.mxu0 0.0
        %v564 = vand.u32 %v350, 4294901760
        %v565 = vsub.f32 %v350, %v564
        %v566 = vand.u32 %v565, 4294901760
        %v567 = vsub.f32 %v565, %v566
        %v568 = vand.u32 %v567, 4294901760
        %569 = vmatmul.mubr.f32.gmra.mrb[0].mxu0 %v568
        %v570 = vpop.f32.mrb[0].mxu0
        %v571 = vadd.f32 0.0, %v570
        %v572 = vpop.f32.mrb[0].mxu0
        %573 = vmatprep.mubr.f32.mxu0 0.0
        %v574 = vand.u32 %v353, 4294901760
        %v575 = vsub.f32 %v353, %v574
        %v576 = vand.u32 %v575, 4294901760
        %v577 = vsub.f32 %v575, %v576
        %v578 = vand.u32 %v577, 4294901760
        %579 = vmatmul.mubr.f32.gmra.mrb[0].mxu0 %v578
        %v580 = vpop.f32.mrb[0].mxu0
        %v581 = vadd.f32 0.0, %v580
        %v582 = vpop.f32.mrb[0].mxu0
        %583 = vdwg.mxu0
        %584 = vmatprep.subr.mxu0 0.0
        %v585 = vand.u32 %v356, 4294901760
        %v586 = vsub.f32 %v356, %v585
        %v587 = vand.u32 %v586, 4294901760
        %v588 = vsub.f32 %v586, %v587
        %v589 = vand.u32 %v588, 4294901760
        %590 = vmatpush1.msra.mxu0 %v589
        %591 = vmatprep.subr.mxu0 0.0
        %592 = vmatpush1.msra.mxu0 0.0
        %593 = vmatprep.subr.mxu0 0.0
        %594 = vmatpush1.msra.mxu0 0.0
        %595 = vmatprep.subr.mxu0 0.0
        %596 = vmatpush1.msra.mxu0 0.0
        %597 = vmatprep.subr.mxu0 0.0
        %598 = vmatpush1.msra.mxu0 0.0
        %599 = vmatprep.subr.mxu0 0.0
        %600 = vmatpush1.msra.mxu0 0.0
        %601 = vmatprep.subr.mxu0 0.0
        %602 = vmatpush1.msra.mxu0 0.0
        %603 = vmatprep.subr.mxu0 0.0
        %604 = vmatpush1.msra.mxu0 0.0
        %605 = vmatprep.subr.mxu0 0.0
        %606 = vmatpush1.msra.mxu0 0.0
        %607 = vmatprep.subr.mxu0 0.0
        %608 = vmatpush1.msra.mxu0 0.0
        %609 = vmatprep.subr.mxu0 0.0
        %610 = vmatpush1.msra.mxu0 0.0
        %611 = vmatprep.subr.mxu0 0.0
        %612 = vmatpush1.msra.mxu0 0.0
        %613 = vmatprep.subr.mxu0 0.0
        %614 = vmatpush1.msra.mxu0 0.0
        %615 = vmatprep.subr.mxu0 0.0
        %616 = vmatpush1.msra.mxu0 0.0
        %617 = vmatprep.subr.mxu0 0.0
        %618 = vmatpush1.msra.mxu0 0.0
        %619 = vmatprep.subr.mxu0 0.0
        %620 = vmatpush1.msra.mxu0 0.0
        %621 = vmatprep.subr.mxu0 0.0
        %622 = vmatpush1.msra.mxu0 0.0
        %623 = vmatprep.subr.mxu0 0.0
        %624 = vmatpush1.msra.mxu0 0.0
        %625 = vmatprep.subr.mxu0 0.0
        %626 = vmatpush1.msra.mxu0 0.0
        %627 = vmatprep.subr.mxu0 0.0
        %628 = vmatpush1.msra.mxu0 0.0
        %629 = vmatprep.subr.mxu0 0.0
        %630 = vmatpush1.msra.mxu0 0.0
        %631 = vmatprep.subr.mxu0 0.0
        %632 = vmatpush1.msra.mxu0 0.0
        %633 = vmatprep.subr.mxu0 0.0
        %634 = vmatpush1.msra.mxu0 0.0
        %635 = vmatprep.subr.mxu0 0.0
        %636 = vmatpush1.msra.mxu0 0.0
        %637 = vmatprep.subr.mxu0 0.0
        %638 = vmatpush1.msra.mxu0 0.0
        %639 = vmatprep.subr.mxu0 0.0
        %640 = vmatpush1.msra.mxu0 0.0
        %641 = vmatprep.subr.mxu0 0.0
        %642 = vmatpush1.msra.mxu0 0.0
        %643 = vmatprep.subr.mxu0 0.0
        %644 = vmatpush1.msra.mxu0 0.0
        %645 = vmatprep.subr.mxu0 0.0
        %646 = vmatpush1.msra.mxu0 0.0
        %647 = vmatprep.subr.mxu0 0.0
        %648 = vmatpush1.msra.mxu0 0.0
        %649 = vmatprep.subr.mxu0 0.0
        %650 = vmatpush1.msra.mxu0 0.0
        %651 = vmatprep.subr.mxu0 0.0
        %652 = vmatpush1.msra.mxu0 0.0
        %653 = vmatprep.mubr.f32.mxu0 0.0
        %v654 = vand.u32 %v308, 4294901760
        %655 = vmatmul.mubr.f32.gmra.mrb[0].mxu0 %v654
        %v656 = vpop.f32.mrb[0].mxu0
        %v657 = vadd.f32 %v431, %v656
        %v658 = vpop.f32.mrb[0].mxu0
        %659 = vmatprep.mubr.f32.mxu0 0.0
        %v660 = vand.u32 %v311, 4294901760
        %661 = vmatmul.mubr.f32.gmra.mrb[0].mxu0 %v660
        %v662 = vpop.f32.mrb[0].mxu0
        %v663 = vadd.f32 %v441, %v662
        %v664 = vpop.f32.mrb[0].mxu0
        %665 = vmatprep.mubr.f32.mxu0 0.0
        %v666 = vand.u32 %v314, 4294901760
        %667 = vmatmul.mubr.f32.gmra.mrb[0].mxu0 %v666
        %v668 = vpop.f32.mrb[0].mxu0
        %v669 = vadd.f32 %v451, %v668
        %v670 = vpop.f32.mrb[0].mxu0
        %671 = vmatprep.mubr.f32.mxu0 0.0
        %v672 = vand.u32 %v317, 4294901760
        %673 = vmatmul.mubr.f32.gmra.mrb[0].mxu0 %v672
        %v674 = vpop.f32.mrb[0].mxu0
        %v675 = vadd.f32 %v461, %v674
        %v676 = vpop.f32.mrb[0].mxu0
        %677 = vmatprep.mubr.f32.mxu0 0.0
        %v678 = vand.u32 %v320, 4294901760
        %679 = vmatmul.mubr.f32.gmra.mrb[0].mxu0 %v678
        %v680 = vpop.f32.mrb[0].mxu0
        %v681 = vadd.f32 %v471, %v680
        %v682 = vpop.f32.mrb[0].mxu0
        %683 = vmatprep.mubr.f32.mxu0 0.0
        %v684 = vand.u32 %v323, 4294901760
        %685 = vmatmul.mubr.f32.gmra.mrb[0].mxu0 %v684
        %v686 = vpop.f32.mrb[0].mxu0
        %v687 = vadd.f32 %v481, %v686
        %v688 = vpop.f32.mrb[0].mxu0
        %689 = vmatprep.mubr.f32.mxu0 0.0
        %v690 = vand.u32 %v326, 4294901760
        %691 = vmatmul.mubr.f32.gmra.mrb[0].mxu0 %v690
        %v692 = vpop.f32.mrb[0].mxu0
        %v693 = vadd.f32 %v491, %v692
        %v694 = vpop.f32.mrb[0].mxu0
        %695 = vmatprep.mubr.f32.mxu0 0.0
        %v696 = vand.u32 %v329, 4294901760
        %697 = vmatmul.mubr.f32.gmra.mrb[0].mxu0 %v696
        %v698 = vpop.f32.mrb[0].mxu0
        %v699 = vadd.f32 %v501, %v698
        %v700 = vpop.f32.mrb[0].mxu0
        %701 = vmatprep.mubr.f32.mxu0 0.0
        %v702 = vand.u32 %v332, 4294901760
        %703 = vmatmul.mubr.f32.gmra.mrb[0].mxu0 %v702
        %v704 = vpop.f32.mrb[0].mxu0
        %v705 = vadd.f32 %v511, %v704
        %v706 = vpop.f32.mrb[0].mxu0
        %707 = vmatprep.mubr.f32.mxu0 0.0
        %v708 = vand.u32 %v335, 4294901760
        %709 = vmatmul.mubr.f32.gmra.mrb[0].mxu0 %v708
        %v710 = vpop.f32.mrb[0].mxu0
        %v711 = vadd.f32 %v521, %v710
        %v712 = vpop.f32.mrb[0].mxu0
        %713 = vmatprep.mubr.f32.mxu0 0.0
        %v714 = vand.u32 %v338, 4294901760
        %715 = vmatmul.mubr.f32.gmra.mrb[0].mxu0 %v714
        %v716 = vpop.f32.mrb[0].mxu0
        %v717 = vadd.f32 %v531, %v716
        %v718 = vpop.f32.mrb[0].mxu0
        %719 = vmatprep.mubr.f32.mxu0 0.0
        %v720 = vand.u32 %v341, 4294901760
        %721 = vmatmul.mubr.f32.gmra.mrb[0].mxu0 %v720
        %v722 = vpop.f32.mrb[0].mxu0
        %v723 = vadd.f32 %v541, %v722
        %v724 = vpop.f32.mrb[0].mxu0
        %725 = vmatprep.mubr.f32.mxu0 0.0
        %v726 = vand.u32 %v344, 4294901760
        %727 = vmatmul.mubr.f32.gmra.mrb[0].mxu0 %v726
        %v728 = vpop.f32.mrb[0].mxu0
        %v729 = vadd.f32 %v551, %v728
        %v730 = vpop.f32.mrb[0].mxu0
        %731 = vmatprep.mubr.f32.mxu0 0.0
        %v732 = vand.u32 %v347, 4294901760
        %733 = vmatmul.mubr.f32.gmra.mrb[0].mxu0 %v732
        %v734 = vpop.f32.mrb[0].mxu0
        %v735 = vadd.f32 %v561, %v734
        %v736 = vpop.f32.mrb[0].mxu0
        %737 = vmatprep.mubr.f32.mxu0 0.0
        %v738 = vand.u32 %v350, 4294901760
        %739 = vmatmul.mubr.f32.gmra.mrb[0].mxu0 %v738
        %v740 = vpop.f32.mrb[0].mxu0
        %v741 = vadd.f32 %v571, %v740
        %v742 = vpop.f32.mrb[0].mxu0
        %743 = vmatprep.mubr.f32.mxu0 0.0
        %v744 = vand.u32 %v353, 4294901760
        %745 = vmatmul.mubr.f32.gmra.mrb[0].mxu0 %v744
        %v746 = vpop.f32.mrb[0].mxu0
        %v747 = vadd.f32 %v581, %v746
        %v748 = vpop.f32.mrb[0].mxu0
        %749 = vdwg.mxu0
        %750 = vmatprep.subr.mxu0 0.0
        %v751 = vand.u32 %v356, 4294901760
        %v752 = vsub.f32 %v356, %v751
        %753 = vmatpush1.msra.mxu0 %v752
        %754 = vmatprep.subr.mxu0 0.0
        %755 = vmatpush1.msra.mxu0 0.0
        %756 = vmatprep.subr.mxu0 0.0
        %757 = vmatpush1.msra.mxu0 0.0
        %758 = vmatprep.subr.mxu0 0.0
        %759 = vmatpush1.msra.mxu0 0.0
        %760 = vmatprep.subr.mxu0 0.0
        %761 = vmatpush1.msra.mxu0 0.0
        %762 = vmatprep.subr.mxu0 0.0
        %763 = vmatpush1.msra.mxu0 0.0
        %764 = vmatprep.subr.mxu0 0.0
        %765 = vmatpush1.msra.mxu0 0.0
        %766 = vmatprep.subr.mxu0 0.0
        %767 = vmatpush1.msra.mxu0 0.0
        %768 = vmatprep.subr.mxu0 0.0
        %769 = vmatpush1.msra.mxu0 0.0
        %770 = vmatprep.subr.mxu0 0.0
        %771 = vmatpush1.msra.mxu0 0.0
        %772 = vmatprep.subr.mxu0 0.0
        %773 = vmatpush1.msra.mxu0 0.0
        %774 = vmatprep.subr.mxu0 0.0
        %775 = vmatpush1.msra.mxu0 0.0
        %776 = vmatprep.subr.mxu0 0.0
        %777 = vmatpush1.msra.mxu0 0.0
        %778 = vmatprep.subr.mxu0 0.0
        %779 = vmatpush1.msra.mxu0 0.0
        %780 = vmatprep.subr.mxu0 0.0
        %781 = vmatpush1.msra.mxu0 0.0
        %782 = vmatprep.subr.mxu0 0.0
        %783 = vmatpush1.msra.mxu0 0.0
        %784 = vmatprep.subr.mxu0 0.0
        %785 = vmatpush1.msra.mxu0 0.0
        %786 = vmatprep.subr.mxu0 0.0
        %787 = vmatpush1.msra.mxu0 0.0
        %788 = vmatprep.subr.mxu0 0.0
        %789 = vmatpush1.msra.mxu0 0.0
        %790 = vmatprep.subr.mxu0 0.0
        %791 = vmatpush1.msra.mxu0 0.0
        %792 = vmatprep.subr.mxu0 0.0
        %793 = vmatpush1.msra.mxu0 0.0
        %794 = vmatprep.subr.mxu0 0.0
        %795 = vmatpush1.msra.mxu0 0.0
        %796 = vmatprep.subr.mxu0 0.0
        %797 = vmatpush1.msra.mxu0 0.0
        %798 = vmatprep.subr.mxu0 0.0
        %799 = vmatpush1.msra.mxu0 0.0
        %800 = vmatprep.subr.mxu0 0.0
        %801 = vmatpush1.msra.mxu0 0.0
        %802 = vmatprep.subr.mxu0 0.0
        %803 = vmatpush1.msra.mxu0 0.0
        %804 = vmatprep.subr.mxu0 0.0
        %805 = vmatpush1.msra.mxu0 0.0
        %806 = vmatprep.subr.mxu0 0.0
        %807 = vmatpush1.msra.mxu0 0.0
        %808 = vmatprep.subr.mxu0 0.0
        %809 = vmatpush1.msra.mxu0 0.0
        %810 = vmatprep.subr.mxu0 0.0
        %811 = vmatpush1.msra.mxu0 0.0
        %812 = vmatprep.subr.mxu0 0.0
        %813 = vmatpush1.msra.mxu0 0.0
        %814 = vmatprep.subr.mxu0 0.0
        %815 = vmatpush1.msra.mxu0 0.0
        %816 = vmatprep.mubr.f32.mxu0 0.0
        %v817 = vand.u32 %v308, 4294901760
        %v818 = vsub.f32 %v308, %v817
        %819 = vmatmul.mubr.f32.gmra.mrb[0].mxu0 %v818
        %v820 = vpop.f32.mrb[0].mxu0
        %v821 = vadd.f32 %v657, %v820
        %v822 = vpop.f32.mrb[0].mxu0
        %823 = vmatprep.mubr.f32.mxu0 0.0
        %v824 = vand.u32 %v311, 4294901760
        %v825 = vsub.f32 %v311, %v824
        %826 = vmatmul.mubr.f32.gmra.mrb[0].mxu0 %v825
        %v827 = vpop.f32.mrb[0].mxu0
        %v828 = vadd.f32 %v663, %v827
        %v829 = vpop.f32.mrb[0].mxu0
        %830 = vmatprep.mubr.f32.mxu0 0.0
        %v831 = vand.u32 %v314, 4294901760
        %v832 = vsub.f32 %v314, %v831
        %833 = vmatmul.mubr.f32.gmra.mrb[0].mxu0 %v832
        %v834 = vpop.f32.mrb[0].mxu0
        %v835 = vadd.f32 %v669, %v834
        %v836 = vpop.f32.mrb[0].mxu0
        %837 = vmatprep.mubr.f32.mxu0 0.0
        %v838 = vand.u32 %v317, 4294901760
        %v839 = vsub.f32 %v317, %v838
        %840 = vmatmul.mubr.f32.gmra.mrb[0].mxu0 %v839
        %v841 = vpop.f32.mrb[0].mxu0
        %v842 = vadd.f32 %v675, %v841
        %v843 = vpop.f32.mrb[0].mxu0
        %844 = vmatprep.mubr.f32.mxu0 0.0
        %v845 = vand.u32 %v320, 4294901760
        %v846 = vsub.f32 %v320, %v845
        %847 = vmatmul.mubr.f32.gmra.mrb[0].mxu0 %v846
        %v848 = vpop.f32.mrb[0].mxu0
        %v849 = vadd.f32 %v681, %v848
        %v850 = vpop.f32.mrb[0].mxu0
        %851 = vmatprep.mubr.f32.mxu0 0.0
        %v852 = vand.u32 %v323, 4294901760
        %v853 = vsub.f32 %v323, %v852
        %854 = vmatmul.mubr.f32.gmra.mrb[0].mxu0 %v853
        %v855 = vpop.f32.mrb[0].mxu0
        %v856 = vadd.f32 %v687, %v855
        %v857 = vpop.f32.mrb[0].mxu0
        %858 = vmatprep.mubr.f32.mxu0 0.0
        %v859 = vand.u32 %v326, 4294901760
        %v860 = vsub.f32 %v326, %v859
        %861 = vmatmul.mubr.f32.gmra.mrb[0].mxu0 %v860
        %v862 = vpop.f32.mrb[0].mxu0
        %v863 = vadd.f32 %v693, %v862
        %v864 = vpop.f32.mrb[0].mxu0
        %865 = vmatprep.mubr.f32.mxu0 0.0
        %v866 = vand.u32 %v329, 4294901760
        %v867 = vsub.f32 %v329, %v866
        %868 = vmatmul.mubr.f32.gmra.mrb[0].mxu0 %v867
        %v869 = vpop.f32.mrb[0].mxu0
        %v870 = vadd.f32 %v699, %v869
        %v871 = vpop.f32.mrb[0].mxu0
        %872 = vmatprep.mubr.f32.mxu0 0.0
        %v873 = vand.u32 %v332, 4294901760
        %v874 = vsub.f32 %v332, %v873
        %875 = vmatmul.mubr.f32.gmra.mrb[0].mxu0 %v874
        %v876 = vpop.f32.mrb[0].mxu0
        %v877 = vadd.f32 %v705, %v876
        %v878 = vpop.f32.mrb[0].mxu0
        %879 = vmatprep.mubr.f32.mxu0 0.0
        %v880 = vand.u32 %v335, 4294901760
        %v881 = vsub.f32 %v335, %v880
        %882 = vmatmul.mubr.f32.gmra.mrb[0].mxu0 %v881
        %v883 = vpop.f32.mrb[0].mxu0
        %v884 = vadd.f32 %v711, %v883
        %v885 = vpop.f32.mrb[0].mxu0
        %886 = vmatprep.mubr.f32.mxu0 0.0
        %v887 = vand.u32 %v338, 4294901760
        %v888 = vsub.f32 %v338, %v887
        %889 = vmatmul.mubr.f32.gmra.mrb[0].mxu0 %v888
        %v890 = vpop.f32.mrb[0].mxu0
        %v891 = vadd.f32 %v717, %v890
        %v892 = vpop.f32.mrb[0].mxu0
        %893 = vmatprep.mubr.f32.mxu0 0.0
        %v894 = vand.u32 %v341, 4294901760
        %v895 = vsub.f32 %v341, %v894
        %896 = vmatmul.mubr.f32.gmra.mrb[0].mxu0 %v895
        %v897 = vpop.f32.mrb[0].mxu0
        %v898 = vadd.f32 %v723, %v897
        %v899 = vpop.f32.mrb[0].mxu0
        %900 = vmatprep.mubr.f32.mxu0 0.0
        %v901 = vand.u32 %v344, 4294901760
        %v902 = vsub.f32 %v344, %v901
        %903 = vmatmul.mubr.f32.gmra.mrb[0].mxu0 %v902
        %v904 = vpop.f32.mrb[0].mxu0
        %v905 = vadd.f32 %v729, %v904
        %v906 = vpop.f32.mrb[0].mxu0
        %907 = vmatprep.mubr.f32.mxu0 0.0
        %v908 = vand.u32 %v347, 4294901760
        %v909 = vsub.f32 %v347, %v908
        %910 = vmatmul.mubr.f32.gmra.mrb[0].mxu0 %v909
        %v911 = vpop.f32.mrb[0].mxu0
        %v912 = vadd.f32 %v735, %v911
        %v913 = vpop.f32.mrb[0].mxu0
        %914 = vmatprep.mubr.f32.mxu0 0.0
        %v915 = vand.u32 %v350, 4294901760
        %v916 = vsub.f32 %v350, %v915
        %917 = vmatmul.mubr.f32.gmra.mrb[0].mxu0 %v916
        %v918 = vpop.f32.mrb[0].mxu0
        %v919 = vadd.f32 %v741, %v918
        %v920 = vpop.f32.mrb[0].mxu0
        %921 = vmatprep.mubr.f32.mxu0 0.0
        %v922 = vand.u32 %v353, 4294901760
        %v923 = vsub.f32 %v353, %v922
        %924 = vmatmul.mubr.f32.gmra.mrb[0].mxu0 %v923
        %v925 = vpop.f32.mrb[0].mxu0
        %v926 = vadd.f32 %v747, %v925
        %v927 = vpop.f32.mrb[0].mxu0
        %928 = vdwg.mxu0
        %929 = vmatprep.subr.mxu0 0.0
        %v930 = vand.u32 %v356, 4294901760
        %931 = vmatpush1.msra.mxu0 %v930
        %932 = vmatprep.subr.mxu0 0.0
        %933 = vmatpush1.msra.mxu0 0.0
        %934 = vmatprep.subr.mxu0 0.0
        %935 = vmatpush1.msra.mxu0 0.0
        %936 = vmatprep.subr.mxu0 0.0
        %937 = vmatpush1.msra.mxu0 0.0
        %938 = vmatprep.subr.mxu0 0.0
        %939 = vmatpush1.msra.mxu0 0.0
        %940 = vmatprep.subr.mxu0 0.0
        %941 = vmatpush1.msra.mxu0 0.0
        %942 = vmatprep.subr.mxu0 0.0
        %943 = vmatpush1.msra.mxu0 0.0
        %944 = vmatprep.subr.mxu0 0.0
        %945 = vmatpush1.msra.mxu0 0.0
        %946 = vmatprep.subr.mxu0 0.0
        %947 = vmatpush1.msra.mxu0 0.0
        %948 = vmatprep.subr.mxu0 0.0
        %949 = vmatpush1.msra.mxu0 0.0
        %950 = vmatprep.subr.mxu0 0.0
        %951 = vmatpush1.msra.mxu0 0.0
        %952 = vmatprep.subr.mxu0 0.0
        %953 = vmatpush1.msra.mxu0 0.0
        %954 = vmatprep.subr.mxu0 0.0
        %955 = vmatpush1.msra.mxu0 0.0
        %956 = vmatprep.subr.mxu0 0.0
        %957 = vmatpush1.msra.mxu0 0.0
        %958 = vmatprep.subr.mxu0 0.0
        %959 = vmatpush1.msra.mxu0 0.0
        %960 = vmatprep.subr.mxu0 0.0
        %961 = vmatpush1.msra.mxu0 0.0
        %962 = vmatprep.subr.mxu0 0.0
        %963 = vmatpush1.msra.mxu0 0.0
        %964 = vmatprep.subr.mxu0 0.0
        %965 = vmatpush1.msra.mxu0 0.0
        %966 = vmatprep.subr.mxu0 0.0
        %967 = vmatpush1.msra.mxu0 0.0
        %968 = vmatprep.subr.mxu0 0.0
        %969 = vmatpush1.msra.mxu0 0.0
        %970 = vmatprep.subr.mxu0 0.0
        %971 = vmatpush1.msra.mxu0 0.0
        %972 = vmatprep.subr.mxu0 0.0
        %973 = vmatpush1.msra.mxu0 0.0
        %974 = vmatprep.subr.mxu0 0.0
        %975 = vmatpush1.msra.mxu0 0.0
        %976 = vmatprep.subr.mxu0 0.0
        %977 = vmatpush1.msra.mxu0 0.0
        %978 = vmatprep.subr.mxu0 0.0
        %979 = vmatpush1.msra.mxu0 0.0
        %980 = vmatprep.subr.mxu0 0.0
        %981 = vmatpush1.msra.mxu0 0.0
        %982 = vmatprep.subr.mxu0 0.0
        %983 = vmatpush1.msra.mxu0 0.0
        %984 = vmatprep.subr.mxu0 0.0
        %985 = vmatpush1.msra.mxu0 0.0
        %986 = vmatprep.subr.mxu0 0.0
        %987 = vmatpush1.msra.mxu0 0.0
        %988 = vmatprep.subr.mxu0 0.0
        %989 = vmatpush1.msra.mxu0 0.0
        %990 = vmatprep.subr.mxu0 0.0
        %991 = vmatpush1.msra.mxu0 0.0
        %992 = vmatprep.subr.mxu0 0.0
        %993 = vmatpush1.msra.mxu0 0.0
        %994 = vmatprep.mubr.f32.mxu0 0.0
        %v995 = vand.u32 %v308, 4294901760
        %v996 = vsub.f32 %v308, %v995
        %v997 = vand.u32 %v996, 4294901760
        %998 = vmatmul.mubr.f32.gmra.mrb[0].mxu0 %v997
        %v999 = vpop.f32.mrb[0].mxu0
        %v1000 = vadd.f32 %v821, %v999
        %v1001 = vpop.f32.mrb[0].mxu0
        %1002 = vmatprep.mubr.f32.mxu0 0.0
        %v1003 = vand.u32 %v311, 4294901760
        %v1004 = vsub.f32 %v311, %v1003
        %v1005 = vand.u32 %v1004, 4294901760
        %1006 = vmatmul.mubr.f32.gmra.mrb[0].mxu0 %v1005
        %v1007 = vpop.f32.mrb[0].mxu0
        %v1008 = vadd.f32 %v828, %v1007
        %v1009 = vpop.f32.mrb[0].mxu0
        %1010 = vmatprep.mubr.f32.mxu0 0.0
        %v1011 = vand.u32 %v314, 4294901760
        %v1012 = vsub.f32 %v314, %v1011
        %v1013 = vand.u32 %v1012, 4294901760
        %1014 = vmatmul.mubr.f32.gmra.mrb[0].mxu0 %v1013
        %v1015 = vpop.f32.mrb[0].mxu0
        %v1016 = vadd.f32 %v835, %v1015
        %v1017 = vpop.f32.mrb[0].mxu0
        %1018 = vmatprep.mubr.f32.mxu0 0.0
        %v1019 = vand.u32 %v317, 4294901760
        %v1020 = vsub.f32 %v317, %v1019
        %v1021 = vand.u32 %v1020, 4294901760
        %1022 = vmatmul.mubr.f32.gmra.mrb[0].mxu0 %v1021
        %v1023 = vpop.f32.mrb[0].mxu0
        %v1024 = vadd.f32 %v842, %v1023
        %v1025 = vpop.f32.mrb[0].mxu0
        %1026 = vmatprep.mubr.f32.mxu0 0.0
        %v1027 = vand.u32 %v320, 4294901760
        %v1028 = vsub.f32 %v320, %v1027
        %v1029 = vand.u32 %v1028, 4294901760
        %1030 = vmatmul.mubr.f32.gmra.mrb[0].mxu0 %v1029
        %v1031 = vpop.f32.mrb[0].mxu0
        %v1032 = vadd.f32 %v849, %v1031
        %v1033 = vpop.f32.mrb[0].mxu0
        %1034 = vmatprep.mubr.f32.mxu0 0.0
        %v1035 = vand.u32 %v323, 4294901760
        %v1036 = vsub.f32 %v323, %v1035
        %v1037 = vand.u32 %v1036, 4294901760
        %1038 = vmatmul.mubr.f32.gmra.mrb[0].mxu0 %v1037
        %v1039 = vpop.f32.mrb[0].mxu0
        %v1040 = vadd.f32 %v856, %v1039
        %v1041 = vpop.f32.mrb[0].mxu0
        %1042 = vmatprep.mubr.f32.mxu0 0.0
        %v1043 = vand.u32 %v326, 4294901760
        %v1044 = vsub.f32 %v326, %v1043
        %v1045 = vand.u32 %v1044, 4294901760
        %1046 = vmatmul.mubr.f32.gmra.mrb[0].mxu0 %v1045
        %v1047 = vpop.f32.mrb[0].mxu0
        %v1048 = vadd.f32 %v863, %v1047
        %v1049 = vpop.f32.mrb[0].mxu0
        %1050 = vmatprep.mubr.f32.mxu0 0.0
        %v1051 = vand.u32 %v329, 4294901760
        %v1052 = vsub.f32 %v329, %v1051
        %v1053 = vand.u32 %v1052, 4294901760
        %1054 = vmatmul.mubr.f32.gmra.mrb[0].mxu0 %v1053
        %v1055 = vpop.f32.mrb[0].mxu0
        %v1056 = vadd.f32 %v870, %v1055
        %v1057 = vpop.f32.mrb[0].mxu0
        %1058 = vmatprep.mubr.f32.mxu0 0.0
        %v1059 = vand.u32 %v332, 4294901760
        %v1060 = vsub.f32 %v332, %v1059
        %v1061 = vand.u32 %v1060, 4294901760
        %1062 = vmatmul.mubr.f32.gmra.mrb[0].mxu0 %v1061
        %v1063 = vpop.f32.mrb[0].mxu0
        %v1064 = vadd.f32 %v877, %v1063
        %v1065 = vpop.f32.mrb[0].mxu0
        %1066 = vmatprep.mubr.f32.mxu0 0.0
        %v1067 = vand.u32 %v335, 4294901760
        %v1068 = vsub.f32 %v335, %v1067
        %v1069 = vand.u32 %v1068, 4294901760
        %1070 = vmatmul.mubr.f32.gmra.mrb[0].mxu0 %v1069
        %v1071 = vpop.f32.mrb[0].mxu0
        %v1072 = vadd.f32 %v884, %v1071
        %v1073 = vpop.f32.mrb[0].mxu0
        %1074 = vmatprep.mubr.f32.mxu0 0.0
        %v1075 = vand.u32 %v338, 4294901760
        %v1076 = vsub.f32 %v338, %v1075
        %v1077 = vand.u32 %v1076, 4294901760
        %1078 = vmatmul.mubr.f32.gmra.mrb[0].mxu0 %v1077
        %v1079 = vpop.f32.mrb[0].mxu0
        %v1080 = vadd.f32 %v891, %v1079
        %v1081 = vpop.f32.mrb[0].mxu0
        %1082 = vmatprep.mubr.f32.mxu0 0.0
        %v1083 = vand.u32 %v341, 4294901760
        %v1084 = vsub.f32 %v341, %v1083
        %v1085 = vand.u32 %v1084, 4294901760
        %1086 = vmatmul.mubr.f32.gmra.mrb[0].mxu0 %v1085
        %v1087 = vpop.f32.mrb[0].mxu0
        %v1088 = vadd.f32 %v898, %v1087
        %v1089 = vpop.f32.mrb[0].mxu0
        %1090 = vmatprep.mubr.f32.mxu0 0.0
        %v1091 = vand.u32 %v344, 4294901760
        %v1092 = vsub.f32 %v344, %v1091
        %v1093 = vand.u32 %v1092, 4294901760
        %1094 = vmatmul.mubr.f32.gmra.mrb[0].mxu0 %v1093
        %v1095 = vpop.f32.mrb[0].mxu0
        %v1096 = vadd.f32 %v905, %v1095
        %v1097 = vpop.f32.mrb[0].mxu0
        %1098 = vmatprep.mubr.f32.mxu0 0.0
        %v1099 = vand.u32 %v347, 4294901760
        %v1100 = vsub.f32 %v347, %v1099
        %v1101 = vand.u32 %v1100, 4294901760
        %1102 = vmatmul.mubr.f32.gmra.mrb[0].mxu0 %v1101
        %v1103 = vpop.f32.mrb[0].mxu0
        %v1104 = vadd.f32 %v912, %v1103
        %v1105 = vpop.f32.mrb[0].mxu0
        %1106 = vmatprep.mubr.f32.mxu0 0.0
        %v1107 = vand.u32 %v350, 4294901760
        %v1108 = vsub.f32 %v350, %v1107
        %v1109 = vand.u32 %v1108, 4294901760
        %1110 = vmatmul.mubr.f32.gmra.mrb[0].mxu0 %v1109
        %v1111 = vpop.f32.mrb[0].mxu0
        %v1112 = vadd.f32 %v919, %v1111
        %v1113 = vpop.f32.mrb[0].mxu0
        %1114 = vmatprep.mubr.f32.mxu0 0.0
        %v1115 = vand.u32 %v353, 4294901760
        %v1116 = vsub.f32 %v353, %v1115
        %v1117 = vand.u32 %v1116, 4294901760
        %1118 = vmatmul.mubr.f32.gmra.mrb[0].mxu0 %v1117
        %v1119 = vpop.f32.mrb[0].mxu0
        %v1120 = vadd.f32 %v926, %v1119
        %v1121 = vpop.f32.mrb[0].mxu0
        %1122 = vdwg.mxu0
        %1123 = vmatprep.subr.mxu0 0.0
        %v1124 = vand.u32 %v356, 4294901760
        %v1125 = vsub.f32 %v356, %v1124
        %v1126 = vand.u32 %v1125, 4294901760
        %1127 = vmatpush1.msra.mxu0 %v1126
        %1128 = vmatprep.subr.mxu0 0.0
        %1129 = vmatpush1.msra.mxu0 0.0
        %1130 = vmatprep.subr.mxu0 0.0
        %1131 = vmatpush1.msra.mxu0 0.0
        %1132 = vmatprep.subr.mxu0 0.0
        %1133 = vmatpush1.msra.mxu0 0.0
        %1134 = vmatprep.subr.mxu0 0.0
        %1135 = vmatpush1.msra.mxu0 0.0
        %1136 = vmatprep.subr.mxu0 0.0
        %1137 = vmatpush1.msra.mxu0 0.0
        %1138 = vmatprep.subr.mxu0 0.0
        %1139 = vmatpush1.msra.mxu0 0.0
        %1140 = vmatprep.subr.mxu0 0.0
        %1141 = vmatpush1.msra.mxu0 0.0
        %1142 = vmatprep.subr.mxu0 0.0
        %1143 = vmatpush1.msra.mxu0 0.0
        %1144 = vmatprep.subr.mxu0 0.0
        %1145 = vmatpush1.msra.mxu0 0.0
        %1146 = vmatprep.subr.mxu0 0.0
        %1147 = vmatpush1.msra.mxu0 0.0
        %1148 = vmatprep.subr.mxu0 0.0
        %1149 = vmatpush1.msra.mxu0 0.0
        %1150 = vmatprep.subr.mxu0 0.0
        %1151 = vmatpush1.msra.mxu0 0.0
        %1152 = vmatprep.subr.mxu0 0.0
        %1153 = vmatpush1.msra.mxu0 0.0
        %1154 = vmatprep.subr.mxu0 0.0
        %1155 = vmatpush1.msra.mxu0 0.0
        %1156 = vmatprep.subr.mxu0 0.0
        %1157 = vmatpush1.msra.mxu0 0.0
        %1158 = vmatprep.subr.mxu0 0.0
        %1159 = vmatpush1.msra.mxu0 0.0
        %1160 = vmatprep.subr.mxu0 0.0
        %1161 = vmatpush1.msra.mxu0 0.0
        %1162 = vmatprep.subr.mxu0 0.0
        %1163 = vmatpush1.msra.mxu0 0.0
        %1164 = vmatprep.subr.mxu0 0.0
        %1165 = vmatpush1.msra.mxu0 0.0
        %1166 = vmatprep.subr.mxu0 0.0
        %1167 = vmatpush1.msra.mxu0 0.0
        %1168 = vmatprep.subr.mxu0 0.0
        %1169 = vmatpush1.msra.mxu0 0.0
        %1170 = vmatprep.subr.mxu0 0.0
        %1171 = vmatpush1.msra.mxu0 0.0
        %1172 = vmatprep.subr.mxu0 0.0
        %1173 = vmatpush1.msra.mxu0 0.0
        %1174 = vmatprep.subr.mxu0 0.0
        %1175 = vmatpush1.msra.mxu0 0.0
        %1176 = vmatprep.subr.mxu0 0.0
        %1177 = vmatpush1.msra.mxu0 0.0
        %1178 = vmatprep.subr.mxu0 0.0
        %1179 = vmatpush1.msra.mxu0 0.0
        %1180 = vmatprep.subr.mxu0 0.0
        %1181 = vmatpush1.msra.mxu0 0.0
        %1182 = vmatprep.subr.mxu0 0.0
        %1183 = vmatpush1.msra.mxu0 0.0
        %1184 = vmatprep.subr.mxu0 0.0
        %1185 = vmatpush1.msra.mxu0 0.0
        %1186 = vmatprep.subr.mxu0 0.0
        %1187 = vmatpush1.msra.mxu0 0.0
        %1188 = vmatprep.subr.mxu0 0.0
        %1189 = vmatpush1.msra.mxu0 0.0
        %1190 = vmatprep.mubr.f32.mxu0 0.0
        %v1191 = vand.u32 %v308, 4294901760
        %1192 = vmatmul.mubr.f32.gmra.mrb[0].mxu0 %v1191
        %v1193 = vpop.f32.mrb[0].mxu0
        %v1194 = vadd.f32 %v1000, %v1193
        %v1195 = vpop.f32.mrb[0].mxu0
        %1196 = vmatprep.mubr.f32.mxu0 0.0
        %v1197 = vand.u32 %v311, 4294901760
        %1198 = vmatmul.mubr.f32.gmra.mrb[0].mxu0 %v1197
        %v1199 = vpop.f32.mrb[0].mxu0
        %v1200 = vadd.f32 %v1008, %v1199
        %v1201 = vpop.f32.mrb[0].mxu0
        %1202 = vmatprep.mubr.f32.mxu0 0.0
        %v1203 = vand.u32 %v314, 4294901760
        %1204 = vmatmul.mubr.f32.gmra.mrb[0].mxu0 %v1203
        %v1205 = vpop.f32.mrb[0].mxu0
        %v1206 = vadd.f32 %v1016, %v1205
        %v1207 = vpop.f32.mrb[0].mxu0
        %1208 = vmatprep.mubr.f32.mxu0 0.0
        %v1209 = vand.u32 %v317, 4294901760
        %1210 = vmatmul.mubr.f32.gmra.mrb[0].mxu0 %v1209
        %v1211 = vpop.f32.mrb[0].mxu0
        %v1212 = vadd.f32 %v1024, %v1211
        %v1213 = vpop.f32.mrb[0].mxu0
        %1214 = vmatprep.mubr.f32.mxu0 0.0
        %v1215 = vand.u32 %v320, 4294901760
        %1216 = vmatmul.mubr.f32.gmra.mrb[0].mxu0 %v1215
        %v1217 = vpop.f32.mrb[0].mxu0
        %v1218 = vadd.f32 %v1032, %v1217
        %v1219 = vpop.f32.mrb[0].mxu0
        %1220 = vmatprep.mubr.f32.mxu0 0.0
        %v1221 = vand.u32 %v323, 4294901760
        %1222 = vmatmul.mubr.f32.gmra.mrb[0].mxu0 %v1221
        %v1223 = vpop.f32.mrb[0].mxu0
        %v1224 = vadd.f32 %v1040, %v1223
        %v1225 = vpop.f32.mrb[0].mxu0
        %1226 = vmatprep.mubr.f32.mxu0 0.0
        %v1227 = vand.u32 %v326, 4294901760
        %1228 = vmatmul.mubr.f32.gmra.mrb[0].mxu0 %v1227
        %v1229 = vpop.f32.mrb[0].mxu0
        %v1230 = vadd.f32 %v1048, %v1229
        %v1231 = vpop.f32.mrb[0].mxu0
        %1232 = vmatprep.mubr.f32.mxu0 0.0
        %v1233 = vand.u32 %v329, 4294901760
        %1234 = vmatmul.mubr.f32.gmra.mrb[0].mxu0 %v1233
        %v1235 = vpop.f32.mrb[0].mxu0
        %v1236 = vadd.f32 %v1056, %v1235
        %v1237 = vpop.f32.mrb[0].mxu0
        %1238 = vmatprep.mubr.f32.mxu0 0.0
        %v1239 = vand.u32 %v332, 4294901760
        %1240 = vmatmul.mubr.f32.gmra.mrb[0].mxu0 %v1239
        %v1241 = vpop.f32.mrb[0].mxu0
        %v1242 = vadd.f32 %v1064, %v1241
        %v1243 = vpop.f32.mrb[0].mxu0
        %1244 = vmatprep.mubr.f32.mxu0 0.0
        %v1245 = vand.u32 %v335, 4294901760
        %1246 = vmatmul.mubr.f32.gmra.mrb[0].mxu0 %v1245
        %v1247 = vpop.f32.mrb[0].mxu0
        %v1248 = vadd.f32 %v1072, %v1247
        %v1249 = vpop.f32.mrb[0].mxu0
        %1250 = vmatprep.mubr.f32.mxu0 0.0
        %v1251 = vand.u32 %v338, 4294901760
        %1252 = vmatmul.mubr.f32.gmra.mrb[0].mxu0 %v1251
        %v1253 = vpop.f32.mrb[0].mxu0
        %v1254 = vadd.f32 %v1080, %v1253
        %v1255 = vpop.f32.mrb[0].mxu0
        %1256 = vmatprep.mubr.f32.mxu0 0.0
        %v1257 = vand.u32 %v341, 4294901760
        %1258 = vmatmul.mubr.f32.gmra.mrb[0].mxu0 %v1257
        %v1259 = vpop.f32.mrb[0].mxu0
        %v1260 = vadd.f32 %v1088, %v1259
        %v1261 = vpop.f32.mrb[0].mxu0
        %1262 = vmatprep.mubr.f32.mxu0 0.0
        %v1263 = vand.u32 %v344, 4294901760
        %1264 = vmatmul.mubr.f32.gmra.mrb[0].mxu0 %v1263
        %v1265 = vpop.f32.mrb[0].mxu0
        %v1266 = vadd.f32 %v1096, %v1265
        %v1267 = vpop.f32.mrb[0].mxu0
        %1268 = vmatprep.mubr.f32.mxu0 0.0
        %v1269 = vand.u32 %v347, 4294901760
        %1270 = vmatmul.mubr.f32.gmra.mrb[0].mxu0 %v1269
        %v1271 = vpop.f32.mrb[0].mxu0
        %v1272 = vadd.f32 %v1104, %v1271
        %v1273 = vpop.f32.mrb[0].mxu0
        %1274 = vmatprep.mubr.f32.mxu0 0.0
        %v1275 = vand.u32 %v350, 4294901760
        %1276 = vmatmul.mubr.f32.gmra.mrb[0].mxu0 %v1275
        %v1277 = vpop.f32.mrb[0].mxu0
        %v1278 = vadd.f32 %v1112, %v1277
        %v1279 = vpop.f32.mrb[0].mxu0
        %1280 = vmatprep.mubr.f32.mxu0 0.0
        %v1281 = vand.u32 %v353, 4294901760
        %1282 = vmatmul.mubr.f32.gmra.mrb[0].mxu0 %v1281
        %v1283 = vpop.f32.mrb[0].mxu0
        %v1284 = vadd.f32 %v1120, %v1283
        %v1285 = vpop.f32.mrb[0].mxu0
        %1286 = vdwg.mxu0
        %1287 = vmatprep.subr.mxu0 0.0
        %v1288 = vand.u32 %v356, 4294901760
        %1289 = vmatpush1.msra.mxu0 %v1288
        %1290 = vmatprep.subr.mxu0 0.0
        %1291 = vmatpush1.msra.mxu0 0.0
        %1292 = vmatprep.subr.mxu0 0.0
        %1293 = vmatpush1.msra.mxu0 0.0
        %1294 = vmatprep.subr.mxu0 0.0
        %1295 = vmatpush1.msra.mxu0 0.0
        %1296 = vmatprep.subr.mxu0 0.0
        %1297 = vmatpush1.msra.mxu0 0.0
        %1298 = vmatprep.subr.mxu0 0.0
        %1299 = vmatpush1.msra.mxu0 0.0
        %1300 = vmatprep.subr.mxu0 0.0
        %1301 = vmatpush1.msra.mxu0 0.0
        %1302 = vmatprep.subr.mxu0 0.0
        %1303 = vmatpush1.msra.mxu0 0.0
        %1304 = vmatprep.subr.mxu0 0.0
        %1305 = vmatpush1.msra.mxu0 0.0
        %1306 = vmatprep.subr.mxu0 0.0
        %1307 = vmatpush1.msra.mxu0 0.0
        %1308 = vmatprep.subr.mxu0 0.0
        %1309 = vmatpush1.msra.mxu0 0.0
        %1310 = vmatprep.subr.mxu0 0.0
        %1311 = vmatpush1.msra.mxu0 0.0
        %1312 = vmatprep.subr.mxu0 0.0
        %1313 = vmatpush1.msra.mxu0 0.0
        %1314 = vmatprep.subr.mxu0 0.0
        %1315 = vmatpush1.msra.mxu0 0.0
        %1316 = vmatprep.subr.mxu0 0.0
        %1317 = vmatpush1.msra.mxu0 0.0
        %1318 = vmatprep.subr.mxu0 0.0
        %1319 = vmatpush1.msra.mxu0 0.0
        %1320 = vmatprep.subr.mxu0 0.0
        %1321 = vmatpush1.msra.mxu0 0.0
        %1322 = vmatprep.subr.mxu0 0.0
        %1323 = vmatpush1.msra.mxu0 0.0
        %1324 = vmatprep.subr.mxu0 0.0
        %1325 = vmatpush1.msra.mxu0 0.0
        %1326 = vmatprep.subr.mxu0 0.0
        %1327 = vmatpush1.msra.mxu0 0.0
        %1328 = vmatprep.subr.mxu0 0.0
        %1329 = vmatpush1.msra.mxu0 0.0
        %1330 = vmatprep.subr.mxu0 0.0
        %1331 = vmatpush1.msra.mxu0 0.0
        %1332 = vmatprep.subr.mxu0 0.0
        %1333 = vmatpush1.msra.mxu0 0.0
        %1334 = vmatprep.subr.mxu0 0.0
        %1335 = vmatpush1.msra.mxu0 0.0
        %1336 = vmatprep.subr.mxu0 0.0
        %1337 = vmatpush1.msra.mxu0 0.0
        %1338 = vmatprep.subr.mxu0 0.0
        %1339 = vmatpush1.msra.mxu0 0.0
        %1340 = vmatprep.subr.mxu0 0.0
        %1341 = vmatpush1.msra.mxu0 0.0
        %1342 = vmatprep.subr.mxu0 0.0
        %1343 = vmatpush1.msra.mxu0 0.0
        %1344 = vmatprep.subr.mxu0 0.0
        %1345 = vmatpush1.msra.mxu0 0.0
        %1346 = vmatprep.subr.mxu0 0.0
        %1347 = vmatpush1.msra.mxu0 0.0
        %1348 = vmatprep.subr.mxu0 0.0
        %1349 = vmatpush1.msra.mxu0 0.0
        %1350 = vmatprep.subr.mxu0 0.0
        %1351 = vmatpush1.msra.mxu0 0.0
        %1352 = vmatprep.mubr.f32.mxu0 0.0
        %v1353 = vand.u32 %v308, 4294901760
        %1354 = vmatmul.mubr.f32.gmra.mrb[0].mxu0 %v1353
        %v1355 = vpop.f32.mrb[0].mxu0
        %v1356 = vadd.f32 %v1194, %v1355
        %v1357 = vpop.f32.mrb[0].mxu0
        %1358 = vmatprep.mubr.f32.mxu0 0.0
        %v1359 = vand.u32 %v311, 4294901760
        %1360 = vmatmul.mubr.f32.gmra.mrb[0].mxu0 %v1359
        %v1361 = vpop.f32.mrb[0].mxu0
        %v1362 = vadd.f32 %v1200, %v1361
        %v1363 = vpop.f32.mrb[0].mxu0
        %1364 = vmatprep.mubr.f32.mxu0 0.0
        %v1365 = vand.u32 %v314, 4294901760
        %1366 = vmatmul.mubr.f32.gmra.mrb[0].mxu0 %v1365
        %v1367 = vpop.f32.mrb[0].mxu0
        %v1368 = vadd.f32 %v1206, %v1367
        %v1369 = vpop.f32.mrb[0].mxu0
        %1370 = vmatprep.mubr.f32.mxu0 0.0
        %v1371 = vand.u32 %v317, 4294901760
        %1372 = vmatmul.mubr.f32.gmra.mrb[0].mxu0 %v1371
        %v1373 = vpop.f32.mrb[0].mxu0
        %v1374 = vadd.f32 %v1212, %v1373
        %v1375 = vpop.f32.mrb[0].mxu0
        %1376 = vmatprep.mubr.f32.mxu0 0.0
        %v1377 = vand.u32 %v320, 4294901760
        %1378 = vmatmul.mubr.f32.gmra.mrb[0].mxu0 %v1377
        %v1379 = vpop.f32.mrb[0].mxu0
        %v1380 = vadd.f32 %v1218, %v1379
        %v1381 = vpop.f32.mrb[0].mxu0
        %1382 = vmatprep.mubr.f32.mxu0 0.0
        %v1383 = vand.u32 %v323, 4294901760
        %1384 = vmatmul.mubr.f32.gmra.mrb[0].mxu0 %v1383
        %v1385 = vpop.f32.mrb[0].mxu0
        %v1386 = vadd.f32 %v1224, %v1385
        %v1387 = vpop.f32.mrb[0].mxu0
        %1388 = vmatprep.mubr.f32.mxu0 0.0
        %v1389 = vand.u32 %v326, 4294901760
        %1390 = vmatmul.mubr.f32.gmra.mrb[0].mxu0 %v1389
        %v1391 = vpop.f32.mrb[0].mxu0
        %v1392 = vadd.f32 %v1230, %v1391
        %v1393 = vpop.f32.mrb[0].mxu0
        %1394 = vmatprep.mubr.f32.mxu0 0.0
        %v1395 = vand.u32 %v329, 4294901760
        %1396 = vmatmul.mubr.f32.gmra.mrb[0].mxu0 %v1395
        %v1397 = vpop.f32.mrb[0].mxu0
        %v1398 = vadd.f32 %v1236, %v1397
        %v1399 = vpop.f32.mrb[0].mxu0
        %1400 = vmatprep.mubr.f32.mxu0 0.0
        %v1401 = vand.u32 %v332, 4294901760
        %1402 = vmatmul.mubr.f32.gmra.mrb[0].mxu0 %v1401
        %v1403 = vpop.f32.mrb[0].mxu0
        %v1404 = vadd.f32 %v1242, %v1403
        %v1405 = vpop.f32.mrb[0].mxu0
        %1406 = vmatprep.mubr.f32.mxu0 0.0
        %v1407 = vand.u32 %v335, 4294901760
        %1408 = vmatmul.mubr.f32.gmra.mrb[0].mxu0 %v1407
        %v1409 = vpop.f32.mrb[0].mxu0
        %v1410 = vadd.f32 %v1248, %v1409
        %v1411 = vpop.f32.mrb[0].mxu0
        %1412 = vmatprep.mubr.f32.mxu0 0.0
        %v1413 = vand.u32 %v338, 4294901760
        %1414 = vmatmul.mubr.f32.gmra.mrb[0].mxu0 %v1413
        %v1415 = vpop.f32.mrb[0].mxu0
        %v1416 = vadd.f32 %v1254, %v1415
        %v1417 = vpop.f32.mrb[0].mxu0
        %1418 = vmatprep.mubr.f32.mxu0 0.0
        %v1419 = vand.u32 %v341, 4294901760
        %1420 = vmatmul.mubr.f32.gmra.mrb[0].mxu0 %v1419
        %v1421 = vpop.f32.mrb[0].mxu0
        %v1422 = vadd.f32 %v1260, %v1421
        %v1423 = vpop.f32.mrb[0].mxu0
        %1424 = vmatprep.mubr.f32.mxu0 0.0
        %v1425 = vand.u32 %v344, 4294901760
        %1426 = vmatmul.mubr.f32.gmra.mrb[0].mxu0 %v1425
        %v1427 = vpop.f32.mrb[0].mxu0
        %v1428 = vadd.f32 %v1266, %v1427
        %v1429 = vpop.f32.mrb[0].mxu0
        %1430 = vmatprep.mubr.f32.mxu0 0.0
        %v1431 = vand.u32 %v347, 4294901760
        %1432 = vmatmul.mubr.f32.gmra.mrb[0].mxu0 %v1431
        %v1433 = vpop.f32.mrb[0].mxu0
        %v1434 = vadd.f32 %v1272, %v1433
        %v1435 = vpop.f32.mrb[0].mxu0
        %1436 = vmatprep.mubr.f32.mxu0 0.0
        %v1437 = vand.u32 %v350, 4294901760
        %1438 = vmatmul.mubr.f32.gmra.mrb[0].mxu0 %v1437
        %v1439 = vpop.f32.mrb[0].mxu0
        %v1440 = vadd.f32 %v1278, %v1439
        %v1441 = vpop.f32.mrb[0].mxu0
        %1442 = vmatprep.mubr.f32.mxu0 0.0
        %v1443 = vand.u32 %v353, 4294901760
        %1444 = vmatmul.mubr.f32.gmra.mrb[0].mxu0 %v1443
        %v1445 = vpop.f32.mrb[0].mxu0
        %v1446 = vadd.f32 %v1284, %v1445
        %v1447 = vpop.f32.mrb[0].mxu0
        %1448 = vdwg.mxu0
        %v1449 = vadd.f32 %v272, %v1356
        %v1450 = vadd.f32 %v272, %v1362
        %v1451 = vadd.f32 %v272, %v1368
        %v1452 = vadd.f32 %v272, %v1374
        %v1453 = vadd.f32 %v272, %v1380
        %v1454 = vadd.f32 %v272, %v1386
        %v1455 = vadd.f32 %v272, %v1392
        %v1456 = vadd.f32 %v272, %v1398
        %v1457 = vadd.f32 %v272, %v1404
        %v1458 = vadd.f32 %v272, %v1410
        %v1459 = vadd.f32 %v272, %v1416
        %v1460 = vadd.f32 %v272, %v1422
        %v1461 = vadd.f32 %v272, %v1428
        %v1462 = vadd.f32 %v272, %v1434
        %v1463 = vadd.f32 %v272, %v1440
        %v1464 = vadd.f32 %v272, %v1446
        %1466 = vset.pattern.permute.xlu0 0
        %1467 = vperm.xlu0 %1466, %v247
        %v1468 = vpop.permute.xlu0 %1467
        %1471 = vset.pattern.permute.xlu0 0
        %1472 = vperm.xlu0 %1471, %v248
        %v1473 = vpop.permute.xlu0 %1472
        %1476 = vset.pattern.permute.xlu0 0
        %1477 = vperm.xlu0 %1476, %v249
        %v1478 = vpop.permute.xlu0 %1477
        %1481 = vset.pattern.permute.xlu0 0
        %1482 = vperm.xlu0 %1481, %v250
        %v1483 = vpop.permute.xlu0 %1482
        %1486 = vset.pattern.permute.xlu0 0
        %1487 = vperm.xlu0 %1486, %v251
        %v1488 = vpop.permute.xlu0 %1487
        %1491 = vset.pattern.permute.xlu0 0
        %1492 = vperm.xlu0 %1491, %v252
        %v1493 = vpop.permute.xlu0 %1492
        %1496 = vset.pattern.permute.xlu0 0
        %1497 = vperm.xlu0 %1496, %v253
        %v1498 = vpop.permute.xlu0 %1497
        %1501 = vset.pattern.permute.xlu0 0
        %1502 = vperm.xlu0 %1501, %v254
        %v1503 = vpop.permute.xlu0 %1502
        %1506 = vset.pattern.permute.xlu0 0
        %1507 = vperm.xlu0 %1506, %v255
        %v1508 = vpop.permute.xlu0 %1507
        %1511 = vset.pattern.permute.xlu0 0
        %1512 = vperm.xlu0 %1511, %v256
        %v1513 = vpop.permute.xlu0 %1512
        %1516 = vset.pattern.permute.xlu0 0
        %1517 = vperm.xlu0 %1516, %v257
        %v1518 = vpop.permute.xlu0 %1517
        %1521 = vset.pattern.permute.xlu0 0
        %1522 = vperm.xlu0 %1521, %v258
        %v1523 = vpop.permute.xlu0 %1522
        %1526 = vset.pattern.permute.xlu0 0
        %1527 = vperm.xlu0 %1526, %v259
        %v1528 = vpop.permute.xlu0 %1527
        %1531 = vset.pattern.permute.xlu0 0
        %1532 = vperm.xlu0 %1531, %v260
        %v1533 = vpop.permute.xlu0 %1532
        %1536 = vset.pattern.permute.xlu0 0
        %1537 = vperm.xlu0 %1536, %v261
        %v1538 = vpop.permute.xlu0 %1537
        %1541 = vset.pattern.permute.xlu0 0
        %1542 = vperm.xlu0 %1541, %v262
        %v1543 = vpop.permute.xlu0 %1542
        %v1545 = vadd.f32 %v1468, %v1449
        %v1546 = vadd.f32 %v1473, %v1450
        %v1547 = vadd.f32 %v1478, %v1451
        %v1548 = vadd.f32 %v1483, %v1452
        %v1549 = vadd.f32 %v1488, %v1453
        %v1550 = vadd.f32 %v1493, %v1454
        %v1551 = vadd.f32 %v1498, %v1455
        %v1552 = vadd.f32 %v1503, %v1456
        %v1553 = vadd.f32 %v1508, %v1457
        %v1554 = vadd.f32 %v1513, %v1458
        %v1555 = vadd.f32 %v1518, %v1459
        %v1556 = vadd.f32 %v1523, %v1460
        %v1557 = vadd.f32 %v1528, %v1461
        %v1558 = vadd.f32 %v1533, %v1462
        %v1559 = vadd.f32 %v1538, %v1463
        %v1560 = vadd.f32 %v1543, %v1464
        %v1561 = vmax.f32 %v1545, 0.0
        %v1562 = vmax.f32 %v1546, 0.0
        %v1563 = vmax.f32 %v1547, 0.0
        %v1564 = vmax.f32 %v1548, 0.0
        %v1565 = vmax.f32 %v1549, 0.0
        %v1566 = vmax.f32 %v1550, 0.0
        %v1567 = vmax.f32 %v1551, 0.0
        %v1568 = vmax.f32 %v1552, 0.0
        %v1569 = vmax.f32 %v1553, 0.0
        %v1570 = vmax.f32 %v1554, 0.0
        %v1571 = vmax.f32 %v1555, 0.0
        %v1572 = vmax.f32 %v1556, 0.0
        %v1573 = vmax.f32 %v1557, 0.0
        %v1574 = vmax.f32 %v1558, 0.0
        %v1575 = vmax.f32 %v1559, 0.0
        %v1576 = vmax.f32 %v1560, 0.0
        %v1577 = vsel %vm265, %v246, 0.0
        %1578 = vadd.xlane.f32.xlu0 %v1577
        %v1579 = vpop.xlane.xlu0 %1578
        %v1580 = vrot.slane %v1579, 4
        %v1581 = vadd.f32 %v1579, %v1580
        %v1582 = vrot.slane %v1581, 2
        %v1583 = vadd.f32 %v1581, %v1582
        %v1584 = vrot.slane %v1583, 1
        %v1585 = vadd.f32 %v1583, %v1584
        %s1586 = vtos %v1585
        %v1587 = vsel %vm265, %v263, 0.0
        %1588 = vadd.xlane.f32.xlu0 %v1587
        %v1589 = vpop.xlane.xlu0 %1588
        %v1590 = vrot.slane %v1589, 4
        %v1591 = vadd.f32 %v1589, %v1590
        %v1592 = vrot.slane %v1591, 2
        %v1593 = vadd.f32 %v1591, %v1592
        %v1594 = vrot.slane %v1593, 1
        %v1595 = vadd.f32 %v1593, %v1594
        %s1596 = vtos %v1595
        %s1597 = sadd.f32 %s1586, %s1596
        %s1598 = smul.f32 %s1597, 0.0
        %v1599 = vmin.f32 %v1561, %v1565
        %v1600 = vmin.f32 %v1562, %v1566
        %v1601 = vmin.f32 %v1563, %v1567
        %v1602 = vmin.f32 %v1564, %v1568
        %v1603 = vmin.f32 %v1599, %v1569
        %v1604 = vmin.f32 %v1600, %v1570
        %v1605 = vmin.f32 %v1601, %v1571
        %v1606 = vmin.f32 %v1602, %v1572
        %v1607 = vmin.f32 %v1603, %v1573
        %v1608 = vmin.f32 %v1604, %v1574
        %v1609 = vmin.f32 %v1605, %v1575
        %v1610 = vmin.f32 %v1606, %v1576
        %v1611 = vmin.f32 %v1607, %v1608
        %v1612 = vmin.f32 %v1609, %v1610
        %v1613 = vmin.f32 %v1611, %v1612
        %v1614 = vrot.slane %v1613, 4
        %v1615 = vmin.f32 %v1613, %v1614
        %v1616 = vrot.slane %v1615, 2
        %v1617 = vmin.f32 %v1615, %v1616
        %v1618 = vrot.slane %v1617, 1
        %v1619 = vmin.f32 %v1617, %v1618
        %v1620 = vld [vmem:[#allocation3] sm:$0x1]
        %v1621 = vadd.f32 %v1620, %v1619
        %v1622 = vstv %s1598
        %v1623 = vadd.f32 %v1621, %v1622
        %1624 = vst [vmem:[#allocation3] sm:$0x1] %v1623
        %v1625 = vld [vmem:[#allocation2] sm:$0xff]
        %v1626 = vld [vmem:[#allocation2 + $0x8] sm:$0xff]
        %v1627 = vld [vmem:[#allocation2 + $0x10] sm:$0xff]
        %v1628 = vld [vmem:[#allocation2 + $0x18] sm:$0xff]
        %v1629 = vld [vmem:[#allocation2 + $0x20] sm:$0xff]
        %v1630 = vld [vmem:[#allocation2 + $0x28] sm:$0xff]
        %v1631 = vld [vmem:[#allocation2 + $0x30] sm:$0xff]
        %v1632 = vld [vmem:[#allocation2 + $0x38] sm:$0xff]
        %v1633 = vld [vmem:[#allocation2 + $0x40] sm:$0xff]
        %v1634 = vld [vmem:[#allocation2 + $0x48] sm:$0xff]
        %v1635 = vld [vmem:[#allocation2 + $0x50] sm:$0xff]
        %v1636 = vld [vmem:[#allocation2 + $0x58] sm:$0xff]
        %v1637 = vld [vmem:[#allocation2 + $0x60] sm:$0xff]
        %v1638 = vld [vmem:[#allocation2 + $0x68] sm:$0xff]
        %v1639 = vld [vmem:[#allocation2 + $0x70] sm:$0xff]
        %v1640 = vld [vmem:[#allocation2 + $0x78] sm:$0xff]
        %v1641 = vmin.f32 %v1625, %v1561
        %v1642 = vmin.f32 %v1626, %v1562
        %v1643 = vmin.f32 %v1627, %v1563
        %v1644 = vmin.f32 %v1628, %v1564
        %v1645 = vmin.f32 %v1629, %v1565
        %v1646 = vmin.f32 %v1630, %v1566
        %v1647 = vmin.f32 %v1631, %v1567
        %v1648 = vmin.f32 %v1632, %v1568
        %v1649 = vmin.f32 %v1633, %v1569
        %v1650 = vmin.f32 %v1634, %v1570
        %v1651 = vmin.f32 %v1635, %v1571
        %v1652 = vmin.f32 %v1636, %v1572
        %v1653 = vmin.f32 %v1637, %v1573
        %v1654 = vmin.f32 %v1638, %v1574
        %v1655 = vmin.f32 %v1639, %v1575
        %v1656 = vmin.f32 %v1640, %v1576
        %1657 = vst [vmem:[#allocation2] sm:$0xff] %v1641
        %1658 = vst [vmem:[#allocation2 + $0x8] sm:$0xff] %v1642
        %1659 = vst [vmem:[#allocation2 + $0x10] sm:$0xff] %v1643
        %1660 = vst [vmem:[#allocation2 + $0x18] sm:$0xff] %v1644
        %1661 = vst [vmem:[#allocation2 + $0x20] sm:$0xff] %v1645
        %1662 = vst [vmem:[#allocation2 + $0x28] sm:$0xff] %v1646
        %1663 = vst [vmem:[#allocation2 + $0x30] sm:$0xff] %v1647
        %1664 = vst [vmem:[#allocation2 + $0x38] sm:$0xff] %v1648
        %1665 = vst [vmem:[#allocation2 + $0x40] sm:$0xff] %v1649
        %1666 = vst [vmem:[#allocation2 + $0x48] sm:$0xff] %v1650
        %1667 = vst [vmem:[#allocation2 + $0x50] sm:$0xff] %v1651
        %1668 = vst [vmem:[#allocation2 + $0x58] sm:$0xff] %v1652
        %1669 = vst [vmem:[#allocation2 + $0x60] sm:$0xff] %v1653
        %1670 = vst [vmem:[#allocation2 + $0x68] sm:$0xff] %v1654
        %1671 = vst [vmem:[#allocation2 + $0x70] sm:$0xff] %v1655
        %1672 = vst [vmem:[#allocation2 + $0x78] sm:$0xff] %v1656
        // Predicated region
        $region37: #{tpu_custom_call.1} parent=31 // pred_check
          %p1673 = pneg %p225
        $region38: #{tpu_custom_call.1} parent=31 // pred_check_branch
          %1675 = sbr.rel (%p1673) target = $region40
        $region39: #{tpu_custom_call.1} parent=31 // pred_region
          %v1676 = vld [vmem:[#allocation2] sm:$0xff]
          %v1677 = vld [vmem:[#allocation2 + $0x8] sm:$0xff]
          %v1678 = vld [vmem:[#allocation2 + $0x10] sm:$0xff]
          %v1679 = vld [vmem:[#allocation2 + $0x18] sm:$0xff]
          %v1680 = vld [vmem:[#allocation2 + $0x20] sm:$0xff]
          %v1681 = vld [vmem:[#allocation2 + $0x28] sm:$0xff]
          %v1682 = vld [vmem:[#allocation2 + $0x30] sm:$0xff]
          %v1683 = vld [vmem:[#allocation2 + $0x38] sm:$0xff]
          %v1684 = vld [vmem:[#allocation2 + $0x40] sm:$0xff]
          %v1685 = vld [vmem:[#allocation2 + $0x48] sm:$0xff]
          %v1686 = vld [vmem:[#allocation2 + $0x50] sm:$0xff]
          %v1687 = vld [vmem:[#allocation2 + $0x58] sm:$0xff]
          %v1688 = vld [vmem:[#allocation2 + $0x60] sm:$0xff]
          %v1689 = vld [vmem:[#allocation2 + $0x68] sm:$0xff]
          %v1690 = vld [vmem:[#allocation2 + $0x70] sm:$0xff]
          %v1691 = vld [vmem:[#allocation2 + $0x78] sm:$0xff]
          %1692 = vmin.xlane.f32.xlu0 %v1676
          %v1693 = vpop.xlane.xlu0 %1692
          %1694 = vmin.xlane.f32.xlu0 %v1677
          %v1695 = vpop.xlane.xlu0 %1694
          %1696 = vmin.xlane.f32.xlu0 %v1678
          %v1697 = vpop.xlane.xlu0 %1696
          %1698 = vmin.xlane.f32.xlu0 %v1679
          %v1699 = vpop.xlane.xlu0 %1698
          %1700 = vmin.xlane.f32.xlu0 %v1680
          %v1701 = vpop.xlane.xlu0 %1700
          %1702 = vmin.xlane.f32.xlu0 %v1681
          %v1703 = vpop.xlane.xlu0 %1702
          %1704 = vmin.xlane.f32.xlu0 %v1682
          %v1705 = vpop.xlane.xlu0 %1704
          %1706 = vmin.xlane.f32.xlu0 %v1683
          %v1707 = vpop.xlane.xlu0 %1706
          %1708 = vmin.xlane.f32.xlu0 %v1684
          %v1709 = vpop.xlane.xlu0 %1708
          %1710 = vmin.xlane.f32.xlu0 %v1685
          %v1711 = vpop.xlane.xlu0 %1710
          %1712 = vmin.xlane.f32.xlu0 %v1686
          %v1713 = vpop.xlane.xlu0 %1712
          %1714 = vmin.xlane.f32.xlu0 %v1687
          %v1715 = vpop.xlane.xlu0 %1714
          %1716 = vmin.xlane.f32.xlu0 %v1688
          %v1717 = vpop.xlane.xlu0 %1716
          %1718 = vmin.xlane.f32.xlu0 %v1689
          %v1719 = vpop.xlane.xlu0 %1718
          %1720 = vmin.xlane.f32.xlu0 %v1690
          %v1721 = vpop.xlane.xlu0 %1720
          %1722 = vmin.xlane.f32.xlu0 %v1691
          %v1723 = vpop.xlane.xlu0 %1722
          %vm1724 = vcmask 7168
          %v1725 = vsel %vm1724, %v1693, 0.0
          %v1726 = vsel %vm1724, %v1695, 0.0
          %v1727 = vadd.f32 %v1725, %v1726
          %v1728 = vsel %vm1724, %v1697, 0.0
          %v1729 = vadd.f32 %v1727, %v1728
          %v1730 = vsel %vm1724, %v1699, 0.0
          %v1731 = vadd.f32 %v1729, %v1730
          %v1732 = vsel %vm1724, %v1701, 0.0
          %v1733 = vadd.f32 %v1731, %v1732
          %v1734 = vsel %vm1724, %v1703, 0.0
          %v1735 = vadd.f32 %v1733, %v1734
          %v1736 = vsel %vm1724, %v1705, 0.0
          %v1737 = vadd.f32 %v1735, %v1736
          %v1738 = vsel %vm1724, %v1707, 0.0
          %v1739 = vadd.f32 %v1737, %v1738
          %v1740 = vsel %vm1724, %v1709, 0.0
          %v1741 = vadd.f32 %v1739, %v1740
          %v1742 = vsel %vm1724, %v1711, 0.0
          %v1743 = vadd.f32 %v1741, %v1742
          %v1744 = vsel %vm1724, %v1713, 0.0
          %v1745 = vadd.f32 %v1743, %v1744
          %v1746 = vsel %vm1724, %v1715, 0.0
          %v1747 = vadd.f32 %v1745, %v1746
          %v1748 = vsel %vm1724, %v1717, 0.0
          %v1749 = vadd.f32 %v1747, %v1748
          %v1750 = vsel %vm1724, %v1719, 0.0
          %v1751 = vadd.f32 %v1749, %v1750
          %v1752 = vsel %vm1724, %v1721, 0.0
          %v1753 = vadd.f32 %v1751, %v1752
          %v1754 = vsel %vm1724, %v1723, 0.0
          %v1755 = vadd.f32 %v1753, %v1754
          %1756 = vadd.xlane.f32.xlu0 %v1755
          %v1757 = vpop.xlane.xlu0 %1756
          %v1758 = vrot.slane %v1757, 4
          %v1759 = vadd.f32 %v1757, %v1758
          %v1760 = vrot.slane %v1759, 2
          %v1761 = vadd.f32 %v1759, %v1760
          %v1762 = vrot.slane %v1761, 1
          %v1763 = vadd.f32 %v1761, %v1762
          %s1764 = vtos %v1763
          %v1765 = vld [vmem:[#allocation3] sm:$0x1]
          %vm1766 = vcmask 1040384
          %v1767 = vsel %vm1766, %v1765, 0.0
          %1768 = vadd.xlane.f32.xlu0 %v1767
          %v1769 = vpop.xlane.xlu0 %1768
          %v1770 = vrot.slane %v1769, 4
          %v1771 = vadd.f32 %v1769, %v1770
          %v1772 = vrot.slane %v1771, 2
          %v1773 = vadd.f32 %v1771, %v1772
          %v1774 = vrot.slane %v1773, 1
          %v1775 = vadd.f32 %v1773, %v1774
          %s1776 = vtos %v1775
          %s1777 = smul.f32 %s1764, 0.0078125
          %s1778 = smul.f32 %s1776, 0.0078125
          %s1779 = sadd.f32 %s1777, %s1778
          %v1780 = vstv %s1779
          %1781 = vst [vmem:[%s208] sm:$0x1] %v1780
        $region40: #{tpu_custom_call.1} parent=31 // pred_fallthru
          _
        %s1782 = sand.u32 %s117, 1
        %s1783 = scalar_lea.sflag [#allocation5], %s1782
        %s1784 = sand.u32 %s117, 1
        %s1785 = scalar_lea.vmem [#allocation4], %s1784
        // Predicated region
        $region41: #{tpu_custom_call.1} parent=31 // pred_check
          %p1786 = pneg %p127
        $region42: #{tpu_custom_call.1} parent=31 // pred_check_branch
          %1788 = sbr.rel (%p1786) target = $region44
        $region43: #{tpu_custom_call.1} parent=31 // pred_region
          %s1790 = ssub.s32 16, 16
          %1791 = vsyncadd %s1783, %s1790
          %s1792 = smul.addr %s21, 16
          %s1793 = scalar_lea.hbm %s3, %s1792
          %s1795 = sshll.u32 %s1785, 4
          %s1796 = int_to_ptr.vmem [resolvable:$true] %s1795
          %1798 = dma.vmem_to_hbm [thread:$0]  %s1796, 16, %s1793, %s1783
        $region44: #{tpu_custom_call.1} parent=31 // pred_fallthru
          _
      $region32: #{tpu_custom_call.1} parent=5 // pred_fallthru
        _
      %p1799 = scmp.le.s32.totalorder 2, %s12
      // Predicated region
      $region45: #{tpu_custom_call.1} parent=5 // pred_check
        %p1800 = pneg %p1799
      $region46: #{tpu_custom_call.1} parent=5 // pred_check_branch
        %1802 = sbr.rel (%p1800) target = $region48
      $region47: #{tpu_custom_call.1} parent=5 // pred_region
        %s1803 = ssub.s32 %s12, 2
        // Predicated region
        $region49: #{tpu_custom_call.1} parent=47 // pred_check
          %p1804 = pneg %p133
        $region50: #{tpu_custom_call.1} parent=47 // pred_check_branch
          %1806 = sbr.rel (%p1804) target = $region52
        $region51: #{tpu_custom_call.1} parent=47 // pred_region
          %s1807 = sand.u32 %s118, 1
          %s1808 = scalar_lea.sflag [#allocation5], %s1807
          %s1809 = sand.u32 %s118, 1
          %s1810 = scalar_lea.vmem [#allocation4], %s1809
          %1811 = dma.done %s1808, 16
        $region52: #{tpu_custom_call.1} parent=47 // pred_fallthru
          _
      $region48: #{tpu_custom_call.1} parent=5 // pred_fallthru
        _
    $region6: #{tpu_custom_call.1} parent=1 // loop_footer
      %s16 = sadd.s32 1, %s12
    $region7: #{tpu_custom_call.1} parent=1 // loop_footer_branch
      %11 = sbr.rel target = $region3
    $region8: #{tpu_custom_call.1} parent=1 // loop_exit
      _
    %1812 = vsyncpa [#allocation5], 1
    %s1813 = scalar_lea.sflag [#allocation5], 1
    %1814 = vsyncpa %s1813, 1

</llo_original>
